<compile_context>
chip_gen: v7x
topology: tpu7x:2x2x1
jax: 0.10.0
libtpu: 0.0.40
codegen_flags: <defaults>
</compile_context>

<pallas_src>
import functools

import jax
import jax.numpy as jnp
from jax.experimental import pallas as pl
from jax.experimental.pallas import tpu as pltpu


def _round_up(x, m):
    return (x + m - 1) // m * m


def _pick_tm(n):
    """Batch-tile size (multiple of 16 for bf16 sublane packing)."""
    if n <= 256:
        # Small batch: one (possibly ragged) tile.
        return max(16, _round_up(n, 16))
    if n <= 1024:
        # Mid-size: guarantee >= 2 grid steps so the "parallel" batch axis can
        # be sharded across v7x's two TensorCores.
        return _round_up((n + 1) // 2, 16)
    # Large: 512-row tiles amortize the ~0.35us/step overhead; total VMEM use
    # stays ~10 MiB (fits every generation, incl. v7x's 64 MiB).
    return 512


def _mlp_kernel(x_ref, w1_ref, b1_ref, w2_ref, b2_ref, o_ref):
    # fc1: (TM, D_in)bf16 @ (D_in, H)bf16 -> f32 accumulate on the MXU.
    h = jnp.dot(x_ref[...], w1_ref[...], preferred_element_type=jnp.float32)
    # bias + ReLU in f32 (v5e VPU has no bf16).
    h = jnp.maximum(h + b1_ref[...], 0.0)
    # fc2: re-quantize activations to bf16 for the MXU, accumulate in f32.
    out = jnp.dot(h.astype(w2_ref.dtype), w2_ref[...],
                  preferred_element_type=jnp.float32)
    o_ref[...] = (out + b2_ref[...]).astype(o_ref.dtype)


def prepare_params(w1, b1, w2, b2):
    """One-time weight prep (hoisted out of the per-call forward).

    w1 : (input_size, hidden)   b1 : (hidden,)
    w2 : (hidden, num_classes)  b2 : (num_classes,)
    Returns kernel-ready params: bf16 weights, fc2 columns padded to a
    multiple of 128 lanes, f32 row-vector biases.
    """
    hidden = w1.shape[1]
    num_classes = w2.shape[1]
    nc_pad = max(128, _round_up(num_classes, 128))

    w1_b = w1.astype(jnp.bfloat16)
    w2_b = jnp.zeros((hidden, nc_pad), jnp.bfloat16).at[:, :num_classes].set(
        w2.astype(jnp.bfloat16))
    b1_2d = b1.reshape(1, hidden).astype(jnp.float32)
    b2_2d = jnp.zeros((1, nc_pad), jnp.float32).at[:, :num_classes].set(
        b2.astype(jnp.float32))
    return w1_b, b1_2d, w2_b, b2_2d


@functools.partial(
    jax.jit,
    static_argnames=("input_size", "num_classes", "single_buffer_weights"))
def _mlp_forward_impl(x, w1_b, b1_2d, w2_b, b2_2d, *, input_size, num_classes,
                      single_buffer_weights):
    x2d = x.reshape(-1, input_size)           # == x.view(-1, input_size)
    if x2d.dtype != jnp.bfloat16:
        x2d = x2d.astype(jnp.bfloat16)        # plain cast, no padded copy
    n, d_in = x2d.shape
    hidden = w1_b.shape[1]
    nc_pad = w2_b.shape[1]

    tm = _pick_tm(n)
    grid = (pl.cdiv(n, tm),)                  # ragged last block, no row pad

    # Resident operands (constant index_map) don't benefit from double
    # buffering; single-buffer them to free VMEM (matters most on v7x).
    w_mode = dict(pipeline_mode=pl.Buffered(1)) if single_buffer_weights else {}

    flops = 2 * n * (d_in * hidden + hidden * nc_pad)
    bytes_accessed = (n * d_in * 2 + d_in * hidden * 2 + hidden * nc_pad * 2
                      + hidden * 4 + nc_pad * 4 + n * nc_pad * 2)

    out_pad = pl.pallas_call(
        _mlp_kernel,
        out_shape=jax.ShapeDtypeStruct((n, nc_pad), jnp.bfloat16),
        grid=grid,
        in_specs=[
            pl.BlockSpec((tm, d_in), lambda i: (i, 0)),                 # x tile
            pl.BlockSpec((d_in, hidden), lambda i: (0, 0), **w_mode),   # w1
            pl.BlockSpec((1, hidden), lambda i: (0, 0), **w_mode),      # b1
            pl.BlockSpec((hidden, nc_pad), lambda i: (0, 0), **w_mode),  # w2
            pl.BlockSpec((1, nc_pad), lambda i: (0, 0), **w_mode),      # b2
        ],
        out_specs=pl.BlockSpec((tm, nc_pad), lambda i: (i, 0)),
        compiler_params=pltpu.CompilerParams(
            dimension_semantics=("parallel",),
            vmem_limit_bytes=32 * 1024 * 1024,
        ),
        cost_estimate=pl.CostEstimate(
            flops=flops, transcendentals=0, bytes_accessed=bytes_accessed),
    )(x2d, w1_b, b1_2d, w2_b, b2_2d)

    # Strip lane padding outside the kernel; up-cast logits to f32.
    return out_pad[:, :num_classes].astype(jnp.float32)


_SINGLE_BUFFER_OK = True


def mlp_forward(x, params, *, input_size, num_classes):
    """Pallas MLP forward. `params` comes from prepare_params()."""
    global _SINGLE_BUFFER_OK
    if _SINGLE_BUFFER_OK:
        try:
            return _mlp_forward_impl(
                x, *params, input_size=input_size, num_classes=num_classes,
                single_buffer_weights=True)
        except Exception:
            # This JAX build rejected pl.Buffered(1); fall back to the default
            # double-buffered pipeline (correctness identical).
            _SINGLE_BUFFER_OK = False
    return _mlp_forward_impl(
        x, *params, input_size=input_size, num_classes=num_classes,
        single_buffer_weights=False)


def _torch_linear_init(key, fan_in, fan_out):
    """Deterministic init mimicking nn.Linear: U(-1/sqrt(fan_in), 1/sqrt(fan_in))."""
    kw, kb = jax.random.split(key)
    bound = 1.0 / (fan_in ** 0.5)
    w = jax.random.uniform(kw, (fan_in, fan_out), jnp.float32, -bound, bound)
    b = jax.random.uniform(kb, (fan_out,), jnp.float32, -bound, bound)
    return w, b


if __name__ == "__main__":
    # Small shapes consistent with the module (MLP over flattened images).
    BATCH, C, HW = 2, 3, 16
    INPUT_SIZE = C * HW * HW      # 768
    HIDDEN = 128
    NUM_CLASSES = 10

    key = jax.random.PRNGKey(0)
    kx, k1, k2 = jax.random.split(key, 3)

    # NCHW image input, flattened inside mlp_forward (as in x.view(-1, D)).
    x = jax.random.normal(kx, (BATCH, C, HW, HW), jnp.float32)
    w1, b1 = _torch_linear_init(k1, INPUT_SIZE, HIDDEN)
    w2, b2 = _torch_linear_init(k2, HIDDEN, NUM_CLASSES)

    params = prepare_params(w1, b1, w2, b2)   # one-time weight prep

    out = mlp_forward(x, params, input_size=INPUT_SIZE, num_classes=NUM_CLASSES)
    out = jax.block_until_ready(out)
    assert out.shape == (BATCH, NUM_CLASSES)

    # Reference 1: same math with bf16-quantized operands (apples-to-apples).
    x2d = x.reshape(-1, INPUT_SIZE)
    xq = x2d.astype(jnp.bfloat16).astype(jnp.float32)
    w1q = w1.astype(jnp.bfloat16).astype(jnp.float32)
    w2q = w2.astype(jnp.bfloat16).astype(jnp.float32)
    hq = jnp.maximum(xq @ w1q + b1, 0.0)
    ref_q = hq.astype(jnp.bfloat16).astype(jnp.float32) @ w2q + b2
    assert jnp.allclose(out, ref_q, atol=2e-2, rtol=2e-2)

    # Reference 2: pure-f32 math (looser tolerance: expected bf16 quant error).
    ref_f32 = jnp.maximum(x2d @ w1 + b1, 0.0) @ w2 + b2
    assert jnp.allclose(out, ref_f32, atol=5e-2, rtol=5e-2)

    print("KERNEL_OK")
</pallas_src>

<mosaic_0001>
module attributes {stable_mosaic.version = 11 : i64} {
  func.func @_mlp_kernel(%arg0: i32, %arg1: memref<16x768xbf16, #tpu.memory_space<vmem>>, %arg2: memref<768x128xbf16, #tpu.memory_space<vmem>>, %arg3: memref<1x128xf32, #tpu.memory_space<vmem>>, %arg4: memref<128x128xbf16, #tpu.memory_space<vmem>>, %arg5: memref<1x128xf32, #tpu.memory_space<vmem>>, %arg6: memref<16x128xbf16, #tpu.memory_space<vmem>>) attributes {dimension_semantics = [#tpu.dimension_semantics<parallel>], iteration_bounds = array<i64: 1>, scalar_prefetch = 0 : i64, scratch_operands = 0 : i64, tpu.core_type = #tpu.core_type<tc>, window_params = [{transform_indices = @transform_0, window_bounds = array<i64: 16, 768>}, {pipeline_mode = #tpu.pipeline_mode<synchronous>, transform_indices = @transform_1, window_bounds = array<i64: 768, 128>}, {pipeline_mode = #tpu.pipeline_mode<synchronous>, transform_indices = @transform_2, window_bounds = array<i64: 1, 128>}, {pipeline_mode = #tpu.pipeline_mode<synchronous>, transform_indices = @transform_3, window_bounds = array<i64: 128, 128>}, {pipeline_mode = #tpu.pipeline_mode<synchronous>, transform_indices = @transform_4, window_bounds = array<i64: 1, 128>}, {transform_indices = @transform_5, window_bounds = array<i64: 16, 128>}]} {
    %c0 = arith.constant 0 : index
    %c0_0 = arith.constant 0 : index
    %0 = vector.load %arg1[%c0, %c0_0] : memref<16x768xbf16, #tpu.memory_space<vmem>>, vector<16x768xbf16>
    %c0_1 = arith.constant 0 : index
    %c0_2 = arith.constant 0 : index
    %1 = vector.load %arg2[%c0_1, %c0_2] : memref<768x128xbf16, #tpu.memory_space<vmem>>, vector<768x128xbf16>
    %cst = arith.constant dense<0.000000e+00> : vector<16x128xf32>
    %2 = tpu.matmul %0, %1, %cst {dimension_numbers = #tpu.dot_dimension_numbers<[1], [0], [0], [1], [0, 0, 1, 1], [], []>} : vector<16x768xbf16>, vector<768x128xbf16>, vector<16x128xf32> -> vector<16x128xf32>
    %c0_3 = arith.constant 0 : index
    %c0_4 = arith.constant 0 : index
    %3 = vector.load %arg3[%c0_3, %c0_4] : memref<1x128xf32, #tpu.memory_space<vmem>>, vector<1x128xf32>
    %4 = vector.broadcast %3 : vector<1x128xf32> to vector<16x128xf32>
    %5 = arith.addf %2, %4 : vector<16x128xf32>
    %cst_5 = arith.constant 0.000000e+00 : f32
    %6 = vector.broadcast %cst_5 : f32 to vector<16x128xf32>
    %7 = arith.maximumf %5, %6 : vector<16x128xf32>
    %8 = arith.truncf %7 : vector<16x128xf32> to vector<16x128xbf16>
    %c0_6 = arith.constant 0 : index
    %c0_7 = arith.constant 0 : index
    %9 = vector.load %arg4[%c0_6, %c0_7] : memref<128x128xbf16, #tpu.memory_space<vmem>>, vector<128x128xbf16>
    %cst_8 = arith.constant dense<0.000000e+00> : vector<16x128xf32>
    %10 = tpu.matmul %8, %9, %cst_8 {dimension_numbers = #tpu.dot_dimension_numbers<[1], [0], [0], [1], [0, 0, 1, 1], [], []>} : vector<16x128xbf16>, vector<128x128xbf16>, vector<16x128xf32> -> vector<16x128xf32>
    %c0_9 = arith.constant 0 : index
    %c0_10 = arith.constant 0 : index
    %11 = vector.load %arg5[%c0_9, %c0_10] : memref<1x128xf32, #tpu.memory_space<vmem>>, vector<1x128xf32>
    %12 = vector.broadcast %11 : vector<1x128xf32> to vector<16x128xf32>
    %13 = arith.addf %10, %12 : vector<16x128xf32>
    %14 = arith.truncf %13 : vector<16x128xf32> to vector<16x128xbf16>
    %c0_11 = arith.constant 0 : index
    %c0_12 = arith.constant 0 : index
    %15 = vector.load %arg6[%c0_11, %c0_12] : memref<16x128xbf16, #tpu.memory_space<vmem>>, vector<16x128xbf16>
    tpu.vector_store %arg6[%c0_11, %c0_12], %14 {strides = array<i32>} : memref<16x128xbf16, #tpu.memory_space<vmem>>, vector<16x128xbf16>,
    return
  }
  func.func @transform_0(%arg0: i32) -> (i32, i32) {
    %c0_i32 = arith.constant 0 : i32
    %c0_i32_0 = arith.constant 0 : i32
    return %arg0, %c0_i32 : i32, i32
  }
  func.func @transform_1(%arg0: i32) -> (i32, i32) {
    %c0_i32 = arith.constant 0 : i32
    %c0_i32_0 = arith.constant 0 : i32
    %c0_i32_1 = arith.constant 0 : i32
    return %c0_i32, %c0_i32_0 : i32, i32
  }
  func.func @transform_2(%arg0: i32) -> (i32, i32) {
    %c0_i32 = arith.constant 0 : i32
    %c0_i32_0 = arith.constant 0 : i32
    %c0_i32_1 = arith.constant 0 : i32
    return %c0_i32, %c0_i32_0 : i32, i32
  }
  func.func @transform_3(%arg0: i32) -> (i32, i32) {
    %c0_i32 = arith.constant 0 : i32
    %c0_i32_0 = arith.constant 0 : i32
    %c0_i32_1 = arith.constant 0 : i32
    return %c0_i32, %c0_i32_0 : i32, i32
  }
  func.func @transform_4(%arg0: i32) -> (i32, i32) {
    %c0_i32 = arith.constant 0 : i32
    %c0_i32_0 = arith.constant 0 : i32
    %c0_i32_1 = arith.constant 0 : i32
    return %c0_i32, %c0_i32_0 : i32, i32
  }
  func.func @transform_5(%arg0: i32) -> (i32, i32) {
    %c0_i32 = arith.constant 0 : i32
    %c0_i32_0 = arith.constant 0 : i32
    return %arg0, %c0_i32 : i32, i32
  }
}

module attributes {stable_mosaic.version = 11 : i64} {
  func.func @_mlp_kernel(%arg0: i32, %arg1: memref<16x768xbf16, #tpu.memory_space<vmem>>, %arg2: memref<768x128xbf16, #tpu.memory_space<vmem>>, %arg3: memref<1x128xf32, #tpu.memory_space<vmem>>, %arg4: memref<128x128xbf16, #tpu.memory_space<vmem>>, %arg5: memref<1x128xf32, #tpu.memory_space<vmem>>, %arg6: memref<16x128xbf16, #tpu.memory_space<vmem>>) attributes {dimension_semantics = [#tpu.dimension_semantics<parallel>], iteration_bounds = array<i64: 1>, scalar_prefetch = 0 : i64, scratch_operands = 0 : i64, tpu.core_type = #tpu.core_type<tc>, window_params = [{transform_indices = @transform_0, window_bounds = array<i64: 16, 768>}, {pipeline_mode = #tpu.pipeline_mode<synchronous>, transform_indices = @transform_1, window_bounds = array<i64: 768, 128>}, {pipeline_mode = #tpu.pipeline_mode<synchronous>, transform_indices = @transform_2, window_bounds = array<i64: 1, 128>}, {pipeline_mode = #tpu.pipeline_mode<synchronous>, transform_indices = @transform_3, window_bounds = array<i64: 128, 128>}, {pipeline_mode = #tpu.pipeline_mode<synchronous>, transform_indices = @transform_4, window_bounds = array<i64: 1, 128>}, {transform_indices = @transform_5, window_bounds = array<i64: 16, 128>}]} {
    %c0 = arith.constant 0 : index
    %c0_0 = arith.constant 0 : index
    %0 = vector.load %arg1[%c0, %c0_0] : memref<16x768xbf16, #tpu.memory_space<vmem>>, vector<16x768xbf16>
    %c0_1 = arith.constant 0 : index
    %c0_2 = arith.constant 0 : index
    %1 = vector.load %arg2[%c0_1, %c0_2] : memref<768x128xbf16, #tpu.memory_space<vmem>>, vector<768x128xbf16>
    %cst = arith.constant dense<0.000000e+00> : vector<16x128xf32>
    %2 = tpu.matmul %0, %1, %cst {dimension_numbers = #tpu.dot_dimension_numbers<[1], [0], [0], [1], [0, 0, 1, 1], [], []>} : vector<16x768xbf16>, vector<768x128xbf16>, vector<16x128xf32> -> vector<16x128xf32>
    %c0_3 = arith.constant 0 : index
    %c0_4 = arith.constant 0 : index
    %3 = vector.load %arg3[%c0_3, %c0_4] : memref<1x128xf32, #tpu.memory_space<vmem>>, vector<1x128xf32>
    %4 = vector.broadcast %3 : vector<1x128xf32> to vector<16x128xf32>
    %5 = arith.addf %2, %4 : vector<16x128xf32>
    %cst_5 = arith.constant 0.000000e+00 : f32
    %6 = vector.broadcast %cst_5 : f32 to vector<16x128xf32>
    %7 = arith.maximumf %5, %6 : vector<16x128xf32>
    %8 = arith.truncf %7 : vector<16x128xf32> to vector<16x128xbf16>
    %c0_6 = arith.constant 0 : index
    %c0_7 = arith.constant 0 : index
    %9 = vector.load %arg4[%c0_6, %c0_7] : memref<128x128xbf16, #tpu.memory_space<vmem>>, vector<128x128xbf16>
    %cst_8 = arith.constant dense<0.000000e+00> : vector<16x128xf32>
    %10 = tpu.matmul %8, %9, %cst_8 {dimension_numbers = #tpu.dot_dimension_numbers<[1], [0], [0], [1], [0, 0, 1, 1], [], []>} : vector<16x128xbf16>, vector<128x128xbf16>, vector<16x128xf32> -> vector<16x128xf32>
    %c0_9 = arith.constant 0 : index
    %c0_10 = arith.constant 0 : index
    %11 = vector.load %arg5[%c0_9, %c0_10] : memref<1x128xf32, #tpu.memory_space<vmem>>, vector<1x128xf32>
    %12 = vector.broadcast %11 : vector<1x128xf32> to vector<16x128xf32>
    %13 = arith.addf %10, %12 : vector<16x128xf32>
    %14 = arith.truncf %13 : vector<16x128xf32> to vector<16x128xbf16>
    %c0_11 = arith.constant 0 : index
    %c0_12 = arith.constant 0 : index
    %15 = vector.load %arg6[%c0_11, %c0_12] : memref<16x128xbf16, #tpu.memory_space<vmem>>, vector<16x128xbf16>
    tpu.vector_store %arg6[%c0_11, %c0_12], %14 {strides = array<i32>} : memref<16x128xbf16, #tpu.memory_space<vmem>>, vector<16x128xbf16>,
    return
  }
  func.func @transform_0(%arg0: i32) -> (i32, i32) {
    %c0_i32 = arith.constant 0 : i32
    %c0_i32_0 = arith.constant 0 : i32
    return %arg0, %c0_i32 : i32, i32
  }
  func.func @transform_1(%arg0: i32) -> (i32, i32) {
    %c0_i32 = arith.constant 0 : i32
    %c0_i32_0 = arith.constant 0 : i32
    %c0_i32_1 = arith.constant 0 : i32
    return %c0_i32, %c0_i32_0 : i32, i32
  }
  func.func @transform_2(%arg0: i32) -> (i32, i32) {
    %c0_i32 = arith.constant 0 : i32
    %c0_i32_0 = arith.constant 0 : i32
    %c0_i32_1 = arith.constant 0 : i32
    return %c0_i32, %c0_i32_0 : i32, i32
  }
  func.func @transform_3(%arg0: i32) -> (i32, i32) {
    %c0_i32 = arith.constant 0 : i32
    %c0_i32_0 = arith.constant 0 : i32
    %c0_i32_1 = arith.constant 0 : i32
    return %c0_i32, %c0_i32_0 : i32, i32
  }
  func.func @transform_4(%arg0: i32) -> (i32, i32) {
    %c0_i32 = arith.constant 0 : i32
    %c0_i32_0 = arith.constant 0 : i32
    %c0_i32_1 = arith.constant 0 : i32
    return %c0_i32, %c0_i32_0 : i32, i32
  }
  func.func @transform_5(%arg0: i32) -> (i32, i32) {
    %c0_i32 = arith.constant 0 : i32
    %c0_i32_0 = arith.constant 0 : i32
    return %arg0, %c0_i32 : i32, i32
  }
}

</mosaic_0001>

<llo_original>
// kernel: _mlp_forward_impl.1
$region0: #{_mlp_forward_impl.1}
  #allocation0 [shape = 'u32[]', space=smem, size = 0x4, offset = 0x4, fixed_abs, tag = 'smem constant byte address 0x4 - core index']
  #allocation1 [shape = 'u32[144,128]{1,0:T(1,128)}', space=vmem, size = 0x12000, scoped, tag = 'internal scratch']
  %s0 = inlined_call_operand.vmem [shape: bf16[2,768], index: 0, kind: input, shape index: {}]
  %s1 = inlined_call_operand.hbm [shape: bf16[768,128], index: 1, kind: input, shape index: {}]
  %s2 = inlined_call_operand.vmem [shape: f32[1,128], index: 2, kind: input, shape index: {}]
  %s3 = inlined_call_operand.vmem [shape: bf16[128,128], index: 3, kind: input, shape index: {}]
  %s4 = inlined_call_operand.vmem [shape: f32[1,128], index: 4, kind: input, shape index: {}]
  %s5 = inlined_call_operand.vmem [shape: bf16[2,128], index: 5, kind: output, shape index: {}]
  %s6 = sld [smem:[#allocation0]]
  $region64: #{_mlp_forward_impl.1} parent=0
    _
  %s8 = ssub.s32 1, %s6
  %s9 = scalar_select 0, %s8, %s6
  $region1: #{_mlp_forward_impl.1} parent=0
    #allocation2 [shape = 'u8[196608]{0}', space=vmem, size = 0x30000, scoped, tag = 'input window, operand 1, single buffered']
    #allocation3 [shape = 's32[1]{0}', space=sflag, size = 0x4, scoped, tag = 'scoped memory for _mlp_forward_impl.1']
    #allocation4 [shape = 'u8[4096]{0}', space=vmem, size = 0x1000, scoped, tag = 'output window, operand 0, single buffered']
    %10 = vsyncpa [#allocation3], 0
    // Predicated region
    $region2: #{_mlp_forward_impl.1} parent=1 // pred_check
      _
    $region3: #{_mlp_forward_impl.1} parent=1 // pred_check_branch
      %12 = sbr.rel (0) target = $region5
    $region4: #{_mlp_forward_impl.1} parent=1 // pred_region
      _
    $region5: #{_mlp_forward_impl.1} parent=1 // pred_fallthru
      _
    // Predicated region
    $region6: #{_mlp_forward_impl.1} parent=1 // pred_check
      _
    $region7: #{_mlp_forward_impl.1} parent=1 // pred_check_branch
      %14 = sbr.rel (0) target = $region9
    $region8: #{_mlp_forward_impl.1} parent=1 // pred_region
      %s16 = ssub.s32 6144, 6144
      %17 = vsyncadd [#allocation3], %s16
      %s18 = sshll.u32 [#allocation2], 4
      %s19 = int_to_ptr.vmem [resolvable:$true] %s18
      %24 = dma.hbm_to_vmem [thread:$0]  %s1, 6144, %s19, [#allocation3], 64, 64, 4
    $region9: #{_mlp_forward_impl.1} parent=1 // pred_fallthru
      _
    // Predicated region
    $region10: #{_mlp_forward_impl.1} parent=1 // pred_check
      _
    $region11: #{_mlp_forward_impl.1} parent=1 // pred_check_branch
      %26 = sbr.rel (0) target = $region13
    $region12: #{_mlp_forward_impl.1} parent=1 // pred_region
      _
    $region13: #{_mlp_forward_impl.1} parent=1 // pred_fallthru
      _
    // Predicated region
    $region14: #{_mlp_forward_impl.1} parent=1 // pred_check
      _
    $region15: #{_mlp_forward_impl.1} parent=1 // pred_check_branch
      %28 = sbr.rel (0) target = $region17
    $region16: #{_mlp_forward_impl.1} parent=1 // pred_region
      _
    $region17: #{_mlp_forward_impl.1} parent=1 // pred_fallthru
      _
    // Predicated region
    $region18: #{_mlp_forward_impl.1} parent=1 // pred_check
      _
    $region19: #{_mlp_forward_impl.1} parent=1 // pred_check_branch
      %30 = sbr.rel (0) target = $region21
    $region20: #{_mlp_forward_impl.1} parent=1 // pred_region
      _
    $region21: #{_mlp_forward_impl.1} parent=1 // pred_fallthru
      _
    // Predicated region
    $region22: #{_mlp_forward_impl.1} parent=1 // pred_check
      _
    $region23: #{_mlp_forward_impl.1} parent=1 // pred_check_branch
      %32 = sbr.rel (0) target = $region25
    $region24: #{_mlp_forward_impl.1} parent=1 // pred_region
      %33 = dma.done [#allocation3], 6144
    $region25: #{_mlp_forward_impl.1} parent=1 // pred_fallthru
      _
    %v35 = vld [vmem:[%s0] sm:$0x3f]
    %v36 = vld [vmem:[%s0 + $0x6] sm:$0x3f]
    %v37 = vld [vmem:[%s0 + $0xc] sm:$0x3f]
    %v38 = vld [vmem:[%s0 + $0x12] sm:$0x3f]
    %v39 = vld [vmem:[%s0 + $0x18] sm:$0x3f]
    %v40 = vld [vmem:[%s0 + $0x1e] sm:$0x3f]
    %v41 = vld [vmem:[%s0 + $0x24] sm:$0x3f]
    %v42 = vld [vmem:[%s0 + $0x2a] sm:$0x3f]
    %v43 = vld [vmem:[#allocation2] sm:$0xf]
    %v44 = vld [vmem:[#allocation2 + $0x4] sm:$0xf]
    %v45 = vld [vmem:[#allocation2 + $0x8] sm:$0xf]
    %v46 = vld [vmem:[#allocation2 + $0xc] sm:$0xf]
    %v47 = vld [vmem:[#allocation2 + $0x10] sm:$0xf]
    %v48 = vld [vmem:[#allocation2 + $0x14] sm:$0xf]
    %v49 = vld [vmem:[#allocation2 + $0x18] sm:$0xf]
    %v50 = vld [vmem:[#allocation2 + $0x1c] sm:$0xf]
    %v51 = vld [vmem:[#allocation2 + $0x20] sm:$0xf]
    %v52 = vld [vmem:[#allocation2 + $0x24] sm:$0xf]
    %v53 = vld [vmem:[#allocation2 + $0x28] sm:$0xf]
    %v54 = vld [vmem:[#allocation2 + $0x2c] sm:$0xf]
    %v55 = vld [vmem:[#allocation2 + $0x30] sm:$0xf]
    %v56 = vld [vmem:[#allocation2 + $0x34] sm:$0xf]
    %v57 = vld [vmem:[#allocation2 + $0x38] sm:$0xf]
    %v58 = vld [vmem:[#allocation2 + $0x3c] sm:$0xf]
    %v59 = vld [vmem:[#allocation2 + $0x40] sm:$0xf]
    %v60 = vld [vmem:[#allocation2 + $0x44] sm:$0xf]
    %v61 = vld [vmem:[#allocation2 + $0x48] sm:$0xf]
    %v62 = vld [vmem:[#allocation2 + $0x4c] sm:$0xf]
    %v63 = vld [vmem:[#allocation2 + $0x50] sm:$0xf]
    %v64 = vld [vmem:[#allocation2 + $0x54] sm:$0xf]
    %v65 = vld [vmem:[#allocation2 + $0x58] sm:$0xf]
    %v66 = vld [vmem:[#allocation2 + $0x5c] sm:$0xf]
    %v67 = vld [vmem:[#allocation2 + $0x60] sm:$0xf]
    %v68 = vld [vmem:[#allocation2 + $0x64] sm:$0xf]
    %v69 = vld [vmem:[#allocation2 + $0x68] sm:$0xf]
    %v70 = vld [vmem:[#allocation2 + $0x6c] sm:$0xf]
    %v71 = vld [vmem:[#allocation2 + $0x70] sm:$0xf]
    %v72 = vld [vmem:[#allocation2 + $0x74] sm:$0xf]
    %v73 = vld [vmem:[#allocation2 + $0x78] sm:$0xf]
    %v74 = vld [vmem:[#allocation2 + $0x7c] sm:$0xf]
    %v75 = vld [vmem:[#allocation2 + $0x80] sm:$0xf]
    %v76 = vld [vmem:[#allocation2 + $0x84] sm:$0xf]
    %v77 = vld [vmem:[#allocation2 + $0x88] sm:$0xf]
    %v78 = vld [vmem:[#allocation2 + $0x8c] sm:$0xf]
    %v79 = vld [vmem:[#allocation2 + $0x90] sm:$0xf]
    %v80 = vld [vmem:[#allocation2 + $0x94] sm:$0xf]
    %v81 = vld [vmem:[#allocation2 + $0x98] sm:$0xf]
    %v82 = vld [vmem:[#allocation2 + $0x9c] sm:$0xf]
    %v83 = vld [vmem:[#allocation2 + $0xa0] sm:$0xf]
    %v84 = vld [vmem:[#allocation2 + $0xa4] sm:$0xf]
    %v85 = vld [vmem:[#allocation2 + $0xa8] sm:$0xf]
    %v86 = vld [vmem:[#allocation2 + $0xac] sm:$0xf]
    %v87 = vld [vmem:[#allocation2 + $0xb0] sm:$0xf]
    %v88 = vld [vmem:[#allocation2 + $0xb4] sm:$0xf]
    %v89 = vld [vmem:[#allocation2 + $0xb8] sm:$0xf]
    %v90 = vld [vmem:[#allocation2 + $0xbc] sm:$0xf]
    %v91 = vld [vmem:[#allocation2 + $0xc0] sm:$0xf]
    %v92 = vld [vmem:[#allocation2 + $0xc4] sm:$0xf]
    %v93 = vld [vmem:[#allocation2 + $0xc8] sm:$0xf]
    %v94 = vld [vmem:[#allocation2 + $0xcc] sm:$0xf]
    %v95 = vld [vmem:[#allocation2 + $0xd0] sm:$0xf]
    %v96 = vld [vmem:[#allocation2 + $0xd4] sm:$0xf]
    %v97 = vld [vmem:[#allocation2 + $0xd8] sm:$0xf]
    %v98 = vld [vmem:[#allocation2 + $0xdc] sm:$0xf]
    %v99 = vld [vmem:[#allocation2 + $0xe0] sm:$0xf]
    %v100 = vld [vmem:[#allocation2 + $0xe4] sm:$0xf]
    %v101 = vld [vmem:[#allocation2 + $0xe8] sm:$0xf]
    %v102 = vld [vmem:[#allocation2 + $0xec] sm:$0xf]
    %v103 = vld [vmem:[#allocation2 + $0xf0] sm:$0xf]
    %v104 = vld [vmem:[#allocation2 + $0xf4] sm:$0xf]
    %v105 = vld [vmem:[#allocation2 + $0xf8] sm:$0xf]
    %v106 = vld [vmem:[#allocation2 + $0xfc] sm:$0xf]
    %v107 = vld [vmem:[#allocation2 + $0x100] sm:$0xf]
    %v108 = vld [vmem:[#allocation2 + $0x104] sm:$0xf]
    %v109 = vld [vmem:[#allocation2 + $0x108] sm:$0xf]
    %v110 = vld [vmem:[#allocation2 + $0x10c] sm:$0xf]
    %v111 = vld [vmem:[#allocation2 + $0x110] sm:$0xf]
    %v112 = vld [vmem:[#allocation2 + $0x114] sm:$0xf]
    %v113 = vld [vmem:[#allocation2 + $0x118] sm:$0xf]
    %v114 = vld [vmem:[#allocation2 + $0x11c] sm:$0xf]
    %v115 = vld [vmem:[#allocation2 + $0x120] sm:$0xf]
    %v116 = vld [vmem:[#allocation2 + $0x124] sm:$0xf]
    %v117 = vld [vmem:[#allocation2 + $0x128] sm:$0xf]
    %v118 = vld [vmem:[#allocation2 + $0x12c] sm:$0xf]
    %v119 = vld [vmem:[#allocation2 + $0x130] sm:$0xf]
    %v120 = vld [vmem:[#allocation2 + $0x134] sm:$0xf]
    %v121 = vld [vmem:[#allocation2 + $0x138] sm:$0xf]
    %v122 = vld [vmem:[#allocation2 + $0x13c] sm:$0xf]
    %v123 = vld [vmem:[#allocation2 + $0x140] sm:$0xf]
    %v124 = vld [vmem:[#allocation2 + $0x144] sm:$0xf]
    %v125 = vld [vmem:[#allocation2 + $0x148] sm:$0xf]
    %v126 = vld [vmem:[#allocation2 + $0x14c] sm:$0xf]
    %v127 = vld [vmem:[#allocation2 + $0x150] sm:$0xf]
    %v128 = vld [vmem:[#allocation2 + $0x154] sm:$0xf]
    %v129 = vld [vmem:[#allocation2 + $0x158] sm:$0xf]
    %v130 = vld [vmem:[#allocation2 + $0x15c] sm:$0xf]
    %v131 = vld [vmem:[#allocation2 + $0x160] sm:$0xf]
    %v132 = vld [vmem:[#allocation2 + $0x164] sm:$0xf]
    %v133 = vld [vmem:[#allocation2 + $0x168] sm:$0xf]
    %v134 = vld [vmem:[#allocation2 + $0x16c] sm:$0xf]
    %v135 = vld [vmem:[#allocation2 + $0x170] sm:$0xf]
    %v136 = vld [vmem:[#allocation2 + $0x174] sm:$0xf]
    %v137 = vld [vmem:[#allocation2 + $0x178] sm:$0xf]
    %v138 = vld [vmem:[#allocation2 + $0x17c] sm:$0xf]
    %v139 = vld [vmem:[%s2] sm:$0x1]
    %v141 = vlaneseq
    %v142 = vshrl.u32 %v141, 7
    %v143 = vsub.s32 0, %v142
    %v144 = vrot.slane %v139, %v143
    %v154 = vcombine.low %v35, %v36
    %v155 = vcombine.high %v35, %v36
    %v156 = vcombine.low %v37, %v38
    %v157 = vcombine.high %v37, %v38
    %v158 = vcombine.low %v39, %v40
    %v159 = vcombine.high %v39, %v40
    %v160 = vcombine.low %v41, %v42
    %v161 = vcombine.high %v41, %v42
    %v163 = vunpack.c.l.s4 1966171168
    %v164 = vunpack.c.0.s8 %v163
    %v165 = vlaneseq
    %v166 = vshrl.u32 %v165, 7
    %v167 = vsub.s32 %v164, %v166
    %v168 = vrot.slane %v154, %v167
    %v170 = vunpack.c.l.s4 1966171168
    %v171 = vunpack.c.0.s8 %v170
    %v172 = vlaneseq
    %v173 = vshrl.u32 %v172, 7
    %v174 = vsub.s32 %v171, %v173
    %v175 = vrot.slane %v155, %v174
    %v177 = vunpack.c.l.s4 1966171168
    %v178 = vunpack.c.0.s8 %v177
    %v179 = vlaneseq
    %v180 = vshrl.u32 %v179, 7
    %v181 = vsub.s32 %v178, %v180
    %v182 = vrot.slane %v156, %v181
    %v184 = vunpack.c.l.s4 1966171168
    %v185 = vunpack.c.0.s8 %v184
    %v186 = vlaneseq
    %v187 = vshrl.u32 %v186, 7
    %v188 = vsub.s32 %v185, %v187
    %v189 = vrot.slane %v157, %v188
    %v191 = vunpack.c.l.s4 1966171168
    %v192 = vunpack.c.0.s8 %v191
    %v193 = vlaneseq
    %v194 = vshrl.u32 %v193, 7
    %v195 = vsub.s32 %v192, %v194
    %v196 = vrot.slane %v158, %v195
    %v198 = vunpack.c.l.s4 1966171168
    %v199 = vunpack.c.0.s8 %v198
    %v200 = vlaneseq
    %v201 = vshrl.u32 %v200, 7
    %v202 = vsub.s32 %v199, %v201
    %v203 = vrot.slane %v159, %v202
    %v205 = vunpack.c.l.s4 1966171168
    %v206 = vunpack.c.0.s8 %v205
    %v207 = vlaneseq
    %v208 = vshrl.u32 %v207, 7
    %v209 = vsub.s32 %v206, %v208
    %v210 = vrot.slane %v160, %v209
    %v212 = vunpack.c.l.s4 1966171168
    %v213 = vunpack.c.0.s8 %v212
    %v214 = vlaneseq
    %v215 = vshrl.u32 %v214, 7
    %v216 = vsub.s32 %v213, %v215
    %v217 = vrot.slane %v161, %v216
    %v218 = vcombine.low %v168, %v182
    %v219 = vcombine.high %v168, %v182
    %v220 = vcombine.low %v175, %v189
    %v221 = vcombine.high %v175, %v189
    %v222 = vcombine.low %v196, %v210
    %v223 = vcombine.high %v196, %v210
    %v224 = vcombine.low %v203, %v217
    %v225 = vcombine.high %v203, %v217
    %v227 = vunpack.c.l.s4 1966171168
    %v228 = vunpack.c.0.s8 %v227
    %v229 = vlaneseq
    %v230 = vshrl.u32 %v229, 7
    %v231 = vsub.s32 %v228, %v230
    %v232 = vrot.slane %v218, %v231
    %v234 = vunpack.c.l.s4 1966171168
    %v235 = vunpack.c.0.s8 %v234
    %v236 = vlaneseq
    %v237 = vshrl.u32 %v236, 7
    %v238 = vsub.s32 %v235, %v237
    %v239 = vrot.slane %v220, %v238
    %v241 = vunpack.c.l.s4 1966171168
    %v242 = vunpack.c.0.s8 %v241
    %v243 = vlaneseq
    %v244 = vshrl.u32 %v243, 7
    %v245 = vsub.s32 %v242, %v244
    %v246 = vrot.slane %v219, %v245
    %v248 = vunpack.c.l.s4 1966171168
    %v249 = vunpack.c.0.s8 %v248
    %v250 = vlaneseq
    %v251 = vshrl.u32 %v250, 7
    %v252 = vsub.s32 %v249, %v251
    %v253 = vrot.slane %v221, %v252
    %v255 = vunpack.c.l.s4 1966171168
    %v256 = vunpack.c.0.s8 %v255
    %v257 = vlaneseq
    %v258 = vshrl.u32 %v257, 7
    %v259 = vsub.s32 %v256, %v258
    %v260 = vrot.slane %v222, %v259
    %v262 = vunpack.c.l.s4 1966171168
    %v263 = vunpack.c.0.s8 %v262
    %v264 = vlaneseq
    %v265 = vshrl.u32 %v264, 7
    %v266 = vsub.s32 %v263, %v265
    %v267 = vrot.slane %v224, %v266
    %v269 = vunpack.c.l.s4 1966171168
    %v270 = vunpack.c.0.s8 %v269
    %v271 = vlaneseq
    %v272 = vshrl.u32 %v271, 7
    %v273 = vsub.s32 %v270, %v272
    %v274 = vrot.slane %v223, %v273
    %v276 = vunpack.c.l.s4 1966171168
    %v277 = vunpack.c.0.s8 %v276
    %v278 = vlaneseq
    %v279 = vshrl.u32 %v278, 7
    %v280 = vsub.s32 %v277, %v279
    %v281 = vrot.slane %v225, %v280
    %v282 = vcombine.low %v232, %v260
    %v283 = vcombine.high %v232, %v260
    %v284 = vcombine.low %v239, %v267
    %v285 = vcombine.low %v246, %v274
    %v286 = vcombine.high %v246, %v274
    %v287 = vcombine.low %v253, %v281
    %v390 = vunpack.c.l.b16 %v43
    %v391 = vunpack.c.l.b16 %v44
    %v392 = vunpack.c.l.b16 %v45
    %v393 = vunpack.c.l.b16 %v46
    %v394 = vunpack.c.l.b16 %v47
    %v395 = vunpack.c.l.b16 %v48
    %v396 = vunpack.c.l.b16 %v49
    %v397 = vunpack.c.l.b16 %v50
    %v398 = vunpack.c.l.b16 %v51
    %v399 = vunpack.c.l.b16 %v52
    %v400 = vunpack.c.l.b16 %v53
    %v401 = vunpack.c.l.b16 %v54
    %v402 = vunpack.c.l.b16 %v55
    %v403 = vunpack.c.l.b16 %v56
    %v404 = vunpack.c.l.b16 %v57
    %v405 = vunpack.c.l.b16 %v58
    %v406 = vunpack.c.l.b16 %v59
    %v407 = vunpack.c.l.b16 %v60
    %v408 = vunpack.c.l.b16 %v61
    %v409 = vunpack.c.l.b16 %v62
    %v410 = vunpack.c.l.b16 %v63
    %v411 = vunpack.c.l.b16 %v64
    %v412 = vunpack.c.l.b16 %v65
    %v413 = vunpack.c.l.b16 %v66
    %v414 = vunpack.c.l.b16 %v67
    %v415 = vunpack.c.l.b16 %v68
    %v416 = vunpack.c.l.b16 %v69
    %v417 = vunpack.c.l.b16 %v70
    %v418 = vunpack.c.l.b16 %v71
    %v419 = vunpack.c.l.b16 %v72
    %v420 = vunpack.c.l.b16 %v73
    %v421 = vunpack.c.l.b16 %v74
    %v422 = vunpack.c.l.b16 %v75
    %v423 = vunpack.c.l.b16 %v76
    %v424 = vunpack.c.l.b16 %v77
    %v425 = vunpack.c.l.b16 %v78
    %v426 = vunpack.c.l.b16 %v79
    %v427 = vunpack.c.l.b16 %v80
    %v428 = vunpack.c.l.b16 %v81
    %v429 = vunpack.c.l.b16 %v82
    %v430 = vunpack.c.l.b16 %v83
    %v431 = vunpack.c.l.b16 %v84
    %v432 = vunpack.c.l.b16 %v85
    %v433 = vunpack.c.l.b16 %v86
    %v434 = vunpack.c.l.b16 %v87
    %v435 = vunpack.c.l.b16 %v88
    %v436 = vunpack.c.l.b16 %v89
    %v437 = vunpack.c.l.b16 %v90
    %v438 = vunpack.c.l.b16 %v91
    %v439 = vunpack.c.l.b16 %v92
    %v440 = vunpack.c.l.b16 %v93
    %v441 = vunpack.c.l.b16 %v94
    %v442 = vunpack.c.l.b16 %v95
    %v443 = vunpack.c.l.b16 %v96
    %v444 = vunpack.c.l.b16 %v97
    %v445 = vunpack.c.l.b16 %v98
    %v446 = vunpack.c.l.b16 %v99
    %v447 = vunpack.c.l.b16 %v100
    %v448 = vunpack.c.l.b16 %v101
    %v449 = vunpack.c.l.b16 %v102
    %v450 = vunpack.c.l.b16 %v103
    %v451 = vunpack.c.l.b16 %v104
    %v452 = vunpack.c.l.b16 %v105
    %v453 = vunpack.c.l.b16 %v106
    %v454 = vunpack.c.l.b16 %v107
    %v455 = vunpack.c.l.b16 %v108
    %v456 = vunpack.c.l.b16 %v109
    %v457 = vunpack.c.l.b16 %v110
    %v458 = vunpack.c.l.b16 %v111
    %v459 = vunpack.c.l.b16 %v112
    %v460 = vunpack.c.l.b16 %v113
    %v461 = vunpack.c.l.b16 %v114
    %v462 = vunpack.c.l.b16 %v115
    %v463 = vunpack.c.l.b16 %v116
    %v464 = vunpack.c.l.b16 %v117
    %v465 = vunpack.c.l.b16 %v118
    %v466 = vunpack.c.l.b16 %v119
    %v467 = vunpack.c.l.b16 %v120
    %v468 = vunpack.c.l.b16 %v121
    %v469 = vunpack.c.l.b16 %v122
    %v470 = vunpack.c.l.b16 %v123
    %v471 = vunpack.c.l.b16 %v124
    %v472 = vunpack.c.l.b16 %v125
    %v473 = vunpack.c.l.b16 %v126
    %v474 = vunpack.c.l.b16 %v127
    %v475 = vunpack.c.l.b16 %v128
    %v476 = vunpack.c.l.b16 %v129
    %v477 = vunpack.c.l.b16 %v130
    %v478 = vunpack.c.l.b16 %v131
    %v479 = vunpack.c.l.b16 %v132
    %v480 = vunpack.c.l.b16 %v133
    %v481 = vunpack.c.l.b16 %v134
    %v482 = vunpack.c.l.b16 %v135
    %v483 = vunpack.c.l.b16 %v136
    %v484 = vunpack.c.l.b16 %v137
    %v485 = vunpack.c.l.b16 %v138
    %v486 = vpack.c.b16 %v391, %v390
    %v487 = vpack.c.b16 %v393, %v392
    %v488 = vpack.c.b16 %v395, %v394
    %v489 = vpack.c.b16 %v397, %v396
    %v490 = vpack.c.b16 %v399, %v398
    %v491 = vpack.c.b16 %v401, %v400
    %v492 = vpack.c.b16 %v403, %v402
    %v493 = vpack.c.b16 %v405, %v404
    %v494 = vpack.c.b16 %v407, %v406
    %v495 = vpack.c.b16 %v409, %v408
    %v496 = vpack.c.b16 %v411, %v410
    %v497 = vpack.c.b16 %v413, %v412
    %v498 = vpack.c.b16 %v415, %v414
    %v499 = vpack.c.b16 %v417, %v416
    %v500 = vpack.c.b16 %v419, %v418
    %v501 = vpack.c.b16 %v421, %v420
    %v502 = vpack.c.b16 %v423, %v422
    %v503 = vpack.c.b16 %v425, %v424
    %v504 = vpack.c.b16 %v427, %v426
    %v505 = vpack.c.b16 %v429, %v428
    %v506 = vpack.c.b16 %v431, %v430
    %v507 = vpack.c.b16 %v433, %v432
    %v508 = vpack.c.b16 %v435, %v434
    %v509 = vpack.c.b16 %v437, %v436
    %v510 = vpack.c.b16 %v439, %v438
    %v511 = vpack.c.b16 %v441, %v440
    %v512 = vpack.c.b16 %v443, %v442
    %v513 = vpack.c.b16 %v445, %v444
    %v514 = vpack.c.b16 %v447, %v446
    %v515 = vpack.c.b16 %v449, %v448
    %v516 = vpack.c.b16 %v451, %v450
    %v517 = vpack.c.b16 %v453, %v452
    %v518 = vpack.c.b16 %v455, %v454
    %v519 = vpack.c.b16 %v457, %v456
    %v520 = vpack.c.b16 %v459, %v458
    %v521 = vpack.c.b16 %v461, %v460
    %v522 = vpack.c.b16 %v463, %v462
    %v523 = vpack.c.b16 %v465, %v464
    %v524 = vpack.c.b16 %v467, %v466
    %v525 = vpack.c.b16 %v469, %v468
    %v526 = vpack.c.b16 %v471, %v470
    %v527 = vpack.c.b16 %v473, %v472
    %v528 = vpack.c.b16 %v475, %v474
    %v529 = vpack.c.b16 %v477, %v476
    %v530 = vpack.c.b16 %v479, %v478
    %v531 = vpack.c.b16 %v481, %v480
    %v532 = vpack.c.b16 %v483, %v482
    %v533 = vpack.c.b16 %v485, %v484
    %582 = vmatprep.subr.bf16.mxu0 0
    %583 = vmatpush1.bf16.msra.mxu0 %v486
    %584 = vmatprep.subr.bf16.mxu0 0
    %585 = vmatpush1.bf16.msra.mxu0 %v487
    %586 = vmatprep.subr.bf16.mxu0 0
    %587 = vmatpush1.bf16.msra.mxu0 %v488
    %588 = vmatprep.subr.bf16.mxu0 0
    %589 = vmatpush1.bf16.msra.mxu0 %v489
    %590 = vmatprep.subr.bf16.mxu0 0
    %591 = vmatpush1.bf16.msra.mxu0 %v490
    %592 = vmatprep.subr.bf16.mxu0 0
    %593 = vmatpush1.bf16.msra.mxu0 %v491
    %594 = vmatprep.subr.bf16.mxu0 0
    %595 = vmatpush1.bf16.msra.mxu0 %v492
    %596 = vmatprep.subr.bf16.mxu0 0
    %597 = vmatpush1.bf16.msra.mxu0 %v493
    %598 = vmatprep.subr.bf16.mxu0 0
    %599 = vmatpush1.bf16.msra.mxu0 %v494
    %600 = vmatprep.subr.bf16.mxu0 0
    %601 = vmatpush1.bf16.msra.mxu0 %v495
    %602 = vmatprep.subr.bf16.mxu0 0
    %603 = vmatpush1.bf16.msra.mxu0 %v496
    %604 = vmatprep.subr.bf16.mxu0 0
    %605 = vmatpush1.bf16.msra.mxu0 %v497
    %606 = vmatprep.subr.bf16.mxu0 0
    %607 = vmatpush1.bf16.msra.mxu0 %v498
    %608 = vmatprep.subr.bf16.mxu0 0
    %609 = vmatpush1.bf16.msra.mxu0 %v499
    %610 = vmatprep.subr.bf16.mxu0 0
    %611 = vmatpush1.bf16.msra.mxu0 %v500
    %612 = vmatprep.subr.bf16.mxu0 0
    %613 = vmatpush1.bf16.msra.mxu0 %v501
    %614 = vmatprep.mubr.bf16.mxu0 %v285
    %615 = vmatmul.mubr.bf16.gmra.mrb[0].mxu0 %v282
    %v616 = vpop.f32.mrb[0].mxu0
    %v617 = vadd.f32 %v144, %v616
    %v618 = vpop.f32.mrb[0].mxu0
    %v619 = vpop.f32.mrb[0].mxu0
    %v620 = vadd.f32 %v144, %v619
    %v621 = vpop.f32.mrb[0].mxu0
    %622 = vdwg.mxu0
    %623 = vmatprep.subr.bf16.mxu0 0
    %624 = vmatpush1.bf16.msra.mxu0 %v502
    %625 = vmatprep.subr.bf16.mxu0 0
    %626 = vmatpush1.bf16.msra.mxu0 %v503
    %627 = vmatprep.subr.bf16.mxu0 0
    %628 = vmatpush1.bf16.msra.mxu0 %v504
    %629 = vmatprep.subr.bf16.mxu0 0
    %630 = vmatpush1.bf16.msra.mxu0 %v505
    %631 = vmatprep.subr.bf16.mxu0 0
    %632 = vmatpush1.bf16.msra.mxu0 %v506
    %633 = vmatprep.subr.bf16.mxu0 0
    %634 = vmatpush1.bf16.msra.mxu0 %v507
    %635 = vmatprep.subr.bf16.mxu0 0
    %636 = vmatpush1.bf16.msra.mxu0 %v508
    %637 = vmatprep.subr.bf16.mxu0 0
    %638 = vmatpush1.bf16.msra.mxu0 %v509
    %639 = vmatprep.subr.bf16.mxu0 0
    %640 = vmatpush1.bf16.msra.mxu0 %v510
    %641 = vmatprep.subr.bf16.mxu0 0
    %642 = vmatpush1.bf16.msra.mxu0 %v511
    %643 = vmatprep.subr.bf16.mxu0 0
    %644 = vmatpush1.bf16.msra.mxu0 %v512
    %645 = vmatprep.subr.bf16.mxu0 0
    %646 = vmatpush1.bf16.msra.mxu0 %v513
    %647 = vmatprep.subr.bf16.mxu0 0
    %648 = vmatpush1.bf16.msra.mxu0 %v514
    %649 = vmatprep.subr.bf16.mxu0 0
    %650 = vmatpush1.bf16.msra.mxu0 %v515
    %651 = vmatprep.subr.bf16.mxu0 0
    %652 = vmatpush1.bf16.msra.mxu0 %v516
    %653 = vmatprep.subr.bf16.mxu0 0
    %654 = vmatpush1.bf16.msra.mxu0 %v517
    %655 = vmatprep.mubr.bf16.mxu0 %v286
    %656 = vmatmul.mubr.bf16.gmra.mrb[0].mxu0 %v283
    %v657 = vpop.f32.mrb[0].mxu0
    %v658 = vadd.f32 %v617, %v657
    %v659 = vpop.f32.mrb[0].mxu0
    %v660 = vpop.f32.mrb[0].mxu0
    %v661 = vadd.f32 %v620, %v660
    %v662 = vpop.f32.mrb[0].mxu0
    %663 = vdwg.mxu0
    %664 = vmatprep.subr.bf16.mxu0 0
    %665 = vmatpush1.bf16.msra.mxu0 %v518
    %666 = vmatprep.subr.bf16.mxu0 0
    %667 = vmatpush1.bf16.msra.mxu0 %v519
    %668 = vmatprep.subr.bf16.mxu0 0
    %669 = vmatpush1.bf16.msra.mxu0 %v520
    %670 = vmatprep.subr.bf16.mxu0 0
    %671 = vmatpush1.bf16.msra.mxu0 %v521
    %672 = vmatprep.subr.bf16.mxu0 0
    %673 = vmatpush1.bf16.msra.mxu0 %v522
    %674 = vmatprep.subr.bf16.mxu0 0
    %675 = vmatpush1.bf16.msra.mxu0 %v523
    %676 = vmatprep.subr.bf16.mxu0 0
    %677 = vmatpush1.bf16.msra.mxu0 %v524
    %678 = vmatprep.subr.bf16.mxu0 0
    %679 = vmatpush1.bf16.msra.mxu0 %v525
    %680 = vmatprep.subr.bf16.mxu0 0
    %681 = vmatpush1.bf16.msra.mxu0 %v526
    %682 = vmatprep.subr.bf16.mxu0 0
    %683 = vmatpush1.bf16.msra.mxu0 %v527
    %684 = vmatprep.subr.bf16.mxu0 0
    %685 = vmatpush1.bf16.msra.mxu0 %v528
    %686 = vmatprep.subr.bf16.mxu0 0
    %687 = vmatpush1.bf16.msra.mxu0 %v529
    %688 = vmatprep.subr.bf16.mxu0 0
    %689 = vmatpush1.bf16.msra.mxu0 %v530
    %690 = vmatprep.subr.bf16.mxu0 0
    %691 = vmatpush1.bf16.msra.mxu0 %v531
    %692 = vmatprep.subr.bf16.mxu0 0
    %693 = vmatpush1.bf16.msra.mxu0 %v532
    %694 = vmatprep.subr.bf16.mxu0 0
    %695 = vmatpush1.bf16.msra.mxu0 %v533
    %696 = vmatprep.mubr.bf16.mxu0 %v287
    %697 = vmatmul.mubr.bf16.gmra.mrb[0].mxu0 %v284
    %v698 = vpop.f32.mrb[0].mxu0
    %v699 = vadd.f32 %v658, %v698
    %v700 = vpop.f32.mrb[0].mxu0
    %v701 = vpop.f32.mrb[0].mxu0
    %v702 = vadd.f32 %v661, %v701
    %v703 = vpop.f32.mrb[0].mxu0
    %704 = vdwg.mxu0
    %v705 = vmax.f32 %v699, 0.0
    %v706 = vmax.f32 %v702, 0.0
    %v707 = vpack.c.bf16 %v706, %v705
    %v708 = vld [vmem:[%s3] sm:$0xf]
    %v709 = vld [vmem:[%s3 + $0x4] sm:$0xf]
    %v710 = vld [vmem:[%s3 + $0x8] sm:$0xf]
    %v711 = vld [vmem:[%s3 + $0xc] sm:$0xf]
    %v712 = vld [vmem:[%s3 + $0x10] sm:$0xf]
    %v713 = vld [vmem:[%s3 + $0x14] sm:$0xf]
    %v714 = vld [vmem:[%s3 + $0x18] sm:$0xf]
    %v715 = vld [vmem:[%s3 + $0x1c] sm:$0xf]
    %v716 = vld [vmem:[%s3 + $0x20] sm:$0xf]
    %v717 = vld [vmem:[%s3 + $0x24] sm:$0xf]
    %v718 = vld [vmem:[%s3 + $0x28] sm:$0xf]
    %v719 = vld [vmem:[%s3 + $0x2c] sm:$0xf]
    %v720 = vld [vmem:[%s3 + $0x30] sm:$0xf]
    %v721 = vld [vmem:[%s3 + $0x34] sm:$0xf]
    %v722 = vld [vmem:[%s3 + $0x38] sm:$0xf]
    %v723 = vld [vmem:[%s3 + $0x3c] sm:$0xf]
    %v724 = vld [vmem:[%s4] sm:$0x1]
    %v726 = vlaneseq
    %v727 = vshrl.u32 %v726, 7
    %v728 = vsub.s32 0, %v727
    %v729 = vrot.slane %v724, %v728
    %v747 = vunpack.c.l.b16 %v708
    %v748 = vunpack.c.l.b16 %v709
    %v749 = vunpack.c.l.b16 %v710
    %v750 = vunpack.c.l.b16 %v711
    %v751 = vunpack.c.l.b16 %v712
    %v752 = vunpack.c.l.b16 %v713
    %v753 = vunpack.c.l.b16 %v714
    %v754 = vunpack.c.l.b16 %v715
    %v755 = vunpack.c.l.b16 %v716
    %v756 = vunpack.c.l.b16 %v717
    %v757 = vunpack.c.l.b16 %v718
    %v758 = vunpack.c.l.b16 %v719
    %v759 = vunpack.c.l.b16 %v720
    %v760 = vunpack.c.l.b16 %v721
    %v761 = vunpack.c.l.b16 %v722
    %v762 = vunpack.c.l.b16 %v723
    %v763 = vpack.c.b16 %v748, %v747
    %v764 = vpack.c.b16 %v750, %v749
    %v765 = vpack.c.b16 %v752, %v751
    %v766 = vpack.c.b16 %v754, %v753
    %v767 = vpack.c.b16 %v756, %v755
    %v768 = vpack.c.b16 %v758, %v757
    %v769 = vpack.c.b16 %v760, %v759
    %v770 = vpack.c.b16 %v762, %v761
    %779 = vmatprep.subr.bf16.mxu0 0
    %780 = vmatpush1.bf16.msra.mxu0 %v763
    %781 = vmatprep.subr.bf16.mxu0 0
    %782 = vmatpush1.bf16.msra.mxu0 %v764
    %783 = vmatprep.subr.bf16.mxu0 0
    %784 = vmatpush1.bf16.msra.mxu0 %v765
    %785 = vmatprep.subr.bf16.mxu0 0
    %786 = vmatpush1.bf16.msra.mxu0 %v766
    %787 = vmatprep.subr.bf16.mxu0 0
    %788 = vmatpush1.bf16.msra.mxu0 %v767
    %789 = vmatprep.subr.bf16.mxu0 0
    %790 = vmatpush1.bf16.msra.mxu0 %v768
    %791 = vmatprep.subr.bf16.mxu0 0
    %792 = vmatpush1.bf16.msra.mxu0 %v769
    %793 = vmatprep.subr.bf16.mxu0 0
    %794 = vmatpush1.bf16.msra.mxu0 %v770
    %795 = vmatprep.subr.bf16.mxu0 0
    %796 = vmatpush1.bf16.msra.mxu0 0
    %797 = vmatprep.subr.bf16.mxu0 0
    %798 = vmatpush1.bf16.msra.mxu0 0
    %799 = vmatprep.subr.bf16.mxu0 0
    %800 = vmatpush1.bf16.msra.mxu0 0
    %801 = vmatprep.subr.bf16.mxu0 0
    %802 = vmatpush1.bf16.msra.mxu0 0
    %803 = vmatprep.subr.bf16.mxu0 0
    %804 = vmatpush1.bf16.msra.mxu0 0
    %805 = vmatprep.subr.bf16.mxu0 0
    %806 = vmatpush1.bf16.msra.mxu0 0
    %807 = vmatprep.subr.bf16.mxu0 0
    %808 = vmatpush1.bf16.msra.mxu0 0
    %809 = vmatprep.subr.bf16.mxu0 0
    %810 = vmatpush1.bf16.msra.mxu0 0
    %811 = vmatprep.mubr.bf16.mxu0 0
    %812 = vmatmul.mubr.bf16.gmra.mrb[0].mxu0 %v707
    %v813 = vpop.f32.mrb[0].mxu0
    %v814 = vadd.f32 %v729, %v813
    %v815 = vpop.f32.mrb[0].mxu0
    %v816 = vpop.f32.mrb[0].mxu0
    %v817 = vadd.f32 %v729, %v816
    %v818 = vpop.f32.mrb[0].mxu0
    %819 = vdwg.mxu0
    %v820 = vpack.c.bf16 %v817, %v814
    %v822 = vcombine.high %v820, %v820
    %v824 = vunpack.c.l.s4 1966171168
    %v825 = vunpack.c.0.s8 %v824
    %v826 = vlaneseq
    %v827 = vshrl.u32 %v826, 7
    %v828 = vsub.s32 %v825, %v827
    %v829 = vrot.slane %v820, %v828
    %v831 = vunpack.c.l.s4 1966171168
    %v832 = vunpack.c.0.s8 %v831
    %v833 = vlaneseq
    %v834 = vshrl.u32 %v833, 7
    %v835 = vsub.s32 %v832, %v834
    %v836 = vrot.slane %v822, %v835
    %v837 = vcombine.high %v829, %v829
    %v838 = vcombine.high %v836, %v836
    %v840 = vunpack.c.l.s4 1966171168
    %v841 = vunpack.c.0.s8 %v840
    %v842 = vlaneseq
    %v843 = vshrl.u32 %v842, 7
    %v844 = vsub.s32 %v841, %v843
    %v845 = vrot.slane %v829, %v844
    %v847 = vunpack.c.l.s4 1966171168
    %v848 = vunpack.c.0.s8 %v847
    %v849 = vlaneseq
    %v850 = vshrl.u32 %v849, 7
    %v851 = vsub.s32 %v848, %v850
    %v852 = vrot.slane %v836, %v851
    %v854 = vunpack.c.l.s4 1966171168
    %v855 = vunpack.c.0.s8 %v854
    %v856 = vlaneseq
    %v857 = vshrl.u32 %v856, 7
    %v858 = vsub.s32 %v855, %v857
    %v859 = vrot.slane %v837, %v858
    %v861 = vunpack.c.l.s4 1966171168
    %v862 = vunpack.c.0.s8 %v861
    %v863 = vlaneseq
    %v864 = vshrl.u32 %v863, 7
    %v865 = vsub.s32 %v862, %v864
    %v866 = vrot.slane %v838, %v865
    %v867 = vcombine.high %v845, %v845
    %v868 = vcombine.high %v852, %v852
    %v869 = vcombine.high %v859, %v859
    %v870 = vcombine.high %v866, %v866
    %879 = vst [vmem:[#allocation4] sm:$0x1] %v845
    %880 = vst [vmem:[#allocation4 + $0x1] sm:$0x1] %v859
    %881 = vst [vmem:[#allocation4 + $0x2] sm:$0x1] %v867
    %882 = vst [vmem:[#allocation4 + $0x3] sm:$0x1] %v869
    %883 = vst [vmem:[#allocation4 + $0x4] sm:$0x1] %v852
    %884 = vst [vmem:[#allocation4 + $0x5] sm:$0x1] %v866
    %885 = vst [vmem:[#allocation4 + $0x6] sm:$0x1] %v868
    %886 = vst [vmem:[#allocation4 + $0x7] sm:$0x1] %v870
    // Predicated region
    $region26: #{_mlp_forward_impl.1} parent=1 // pred_check
      _
    $region27: #{_mlp_forward_impl.1} parent=1 // pred_check_branch
      %888 = sbr.rel (0) target = $region29
    $region28: #{_mlp_forward_impl.1} parent=1 // pred_region
      // Predicated region
      $region30: #{_mlp_forward_impl.1} parent=28 // pred_check
        _
      $region31: #{_mlp_forward_impl.1} parent=28 // pred_check_branch
        %890 = sbr.rel (0) target = $region33
      $region32: #{_mlp_forward_impl.1} parent=28 // pred_region
        // Predicated region
        $region34: #{_mlp_forward_impl.1} parent=32 // pred_check
          _
        $region35: #{_mlp_forward_impl.1} parent=32 // pred_check_branch
          %892 = sbr.rel target = $region37
        $region36: #{_mlp_forward_impl.1} parent=32 // pred_region
          // Predicated region
          $region49: #{_mlp_forward_impl.1} parent=36 // pred_check
            _
          $region50: #{_mlp_forward_impl.1} parent=36 // pred_check_branch
            %907 = sbr.rel (0) target = $region52
          $region51: #{_mlp_forward_impl.1} parent=36 // pred_region
            loop: start=0, step=1, limit=1
            $region53: #{_mlp_forward_impl.1} parent=51 // loop_pre_header
              _
            $region54: #{_mlp_forward_impl.1} parent=51 // loop_header
              %s910 = sphi 0, %s914
              %p911 = scmp.ge.s32.totalorder %s910, 1
              %s915 = sphi [#allocation4], [#allocation4]
              %s916 = sphi %s5, %s5
            $region55: #{_mlp_forward_impl.1} parent=51 // loop_header_branch
              %913 = sbr.rel (%p911) target = $region59
            $region56: #{_mlp_forward_impl.1} parent=51 // loop_body
              %v917 = vld [vmem:[%s915] sm:$0x1]
              %918 = vst [vmem:[%s916] sm:$0x1] %v917
            $region57: #{_mlp_forward_impl.1} parent=51 // loop_footer
              %s914 = sadd.s32 1, %s910
            $region58: #{_mlp_forward_impl.1} parent=51 // loop_footer_branch
              %909 = sbr.rel target = $region54
            $region59: #{_mlp_forward_impl.1} parent=51 // loop_exit
              _
          $region52: #{_mlp_forward_impl.1} parent=36 // pred_fallthru
            _
        $region37: #{_mlp_forward_impl.1} parent=32 // pred_fallthru
          _
        // Predicated region
        $region38: #{_mlp_forward_impl.1} parent=32 // pred_check
          _
        $region39: #{_mlp_forward_impl.1} parent=32 // pred_check_branch
          %894 = sbr.rel (0) target = $region41
        $region40: #{_mlp_forward_impl.1} parent=32 // pred_region
          loop: start=0, step=1, limit=1
          $region42: #{_mlp_forward_impl.1} parent=40 // loop_pre_header
            _
          $region43: #{_mlp_forward_impl.1} parent=40 // loop_header
            %s897 = sphi 0, %s901
            %p898 = scmp.ge.s32.totalorder %s897, 1
            %s902 = sphi [#allocation4], [#allocation4]
            %s903 = sphi %s5, %s5
          $region44: #{_mlp_forward_impl.1} parent=40 // loop_header_branch
            %900 = sbr.rel (%p898) target = $region48
          $region45: #{_mlp_forward_impl.1} parent=40 // loop_body
            %v904 = vld [vmem:[%s902] sm:$0x1]
            %905 = vst [vmem:[%s903] sm:$0x1] %v904
          $region46: #{_mlp_forward_impl.1} parent=40 // loop_footer
            %s901 = sadd.s32 1, %s897
          $region47: #{_mlp_forward_impl.1} parent=40 // loop_footer_branch
            %896 = sbr.rel target = $region43
          $region48: #{_mlp_forward_impl.1} parent=40 // loop_exit
            _
        $region41: #{_mlp_forward_impl.1} parent=32 // pred_fallthru
          _
      $region33: #{_mlp_forward_impl.1} parent=28 // pred_fallthru
        _
      %919 = vnop
    $region29: #{_mlp_forward_impl.1} parent=1 // pred_fallthru
      _
    // Predicated region
    $region60: #{_mlp_forward_impl.1} parent=1 // pred_check
      _
    $region61: #{_mlp_forward_impl.1} parent=1 // pred_check_branch
      %921 = sbr.rel (0) target = $region63
    $region62: #{_mlp_forward_impl.1} parent=1 // pred_region
      _
    $region63: #{_mlp_forward_impl.1} parent=1 // pred_fallthru
      _
    %922 = vsyncpa [#allocation3], 1

// kernel: _mlp_forward_impl.1
$region0: #{_mlp_forward_impl.1}
  #allocation0 [shape = 'u32[]', space=smem, size = 0x4, offset = 0x4, fixed_abs, tag = 'smem constant byte address 0x4 - core index']
  #allocation1 [shape = 'u32[144,128]{1,0:T(1,128)}', space=vmem, size = 0x12000, scoped, tag = 'internal scratch']
  %s0 = inlined_call_operand.vmem [shape: bf16[2,768], index: 0, kind: input, shape index: {}]
  %s1 = inlined_call_operand.hbm [shape: bf16[768,128], index: 1, kind: input, shape index: {}]
  %s2 = inlined_call_operand.vmem [shape: f32[1,128], index: 2, kind: input, shape index: {}]
  %s3 = inlined_call_operand.vmem [shape: bf16[128,128], index: 3, kind: input, shape index: {}]
  %s4 = inlined_call_operand.vmem [shape: f32[1,128], index: 4, kind: input, shape index: {}]
  %s5 = inlined_call_operand.vmem [shape: bf16[2,128], index: 5, kind: output, shape index: {}]
  %s6 = sld [smem:[#allocation0]]
  $region64: #{_mlp_forward_impl.1} parent=0
    _
  %s8 = ssub.s32 1, %s6
  %s9 = scalar_select 0, %s8, %s6
  $region1: #{_mlp_forward_impl.1} parent=0
    #allocation2 [shape = 'u8[196608]{0}', space=vmem, size = 0x30000, scoped, tag = 'input window, operand 1, single buffered']
    #allocation3 [shape = 's32[1]{0}', space=sflag, size = 0x4, scoped, tag = 'scoped memory for _mlp_forward_impl.1']
    #allocation4 [shape = 'u8[4096]{0}', space=vmem, size = 0x1000, scoped, tag = 'output window, operand 0, single buffered']
    %10 = vsyncpa [#allocation3], 0
    // Predicated region
    $region2: #{_mlp_forward_impl.1} parent=1 // pred_check
      _
    $region3: #{_mlp_forward_impl.1} parent=1 // pred_check_branch
      %12 = sbr.rel (0) target = $region5
    $region4: #{_mlp_forward_impl.1} parent=1 // pred_region
      _
    $region5: #{_mlp_forward_impl.1} parent=1 // pred_fallthru
      _
    // Predicated region
    $region6: #{_mlp_forward_impl.1} parent=1 // pred_check
      _
    $region7: #{_mlp_forward_impl.1} parent=1 // pred_check_branch
      %14 = sbr.rel (0) target = $region9
    $region8: #{_mlp_forward_impl.1} parent=1 // pred_region
      %s16 = ssub.s32 6144, 6144
      %17 = vsyncadd [#allocation3], %s16
      %s18 = sshll.u32 [#allocation2], 4
      %s19 = int_to_ptr.vmem [resolvable:$true] %s18
      %24 = dma.hbm_to_vmem [thread:$0]  %s1, 6144, %s19, [#allocation3], 64, 64, 4
    $region9: #{_mlp_forward_impl.1} parent=1 // pred_fallthru
      _
    // Predicated region
    $region10: #{_mlp_forward_impl.1} parent=1 // pred_check
      _
    $region11: #{_mlp_forward_impl.1} parent=1 // pred_check_branch
      %26 = sbr.rel (0) target = $region13
    $region12: #{_mlp_forward_impl.1} parent=1 // pred_region
      _
    $region13: #{_mlp_forward_impl.1} parent=1 // pred_fallthru
      _
    // Predicated region
    $region14: #{_mlp_forward_impl.1} parent=1 // pred_check
      _
    $region15: #{_mlp_forward_impl.1} parent=1 // pred_check_branch
      %28 = sbr.rel (0) target = $region17
    $region16: #{_mlp_forward_impl.1} parent=1 // pred_region
      _
    $region17: #{_mlp_forward_impl.1} parent=1 // pred_fallthru
      _
    // Predicated region
    $region18: #{_mlp_forward_impl.1} parent=1 // pred_check
      _
    $region19: #{_mlp_forward_impl.1} parent=1 // pred_check_branch
      %30 = sbr.rel (0) target = $region21
    $region20: #{_mlp_forward_impl.1} parent=1 // pred_region
      _
    $region21: #{_mlp_forward_impl.1} parent=1 // pred_fallthru
      _
    // Predicated region
    $region22: #{_mlp_forward_impl.1} parent=1 // pred_check
      _
    $region23: #{_mlp_forward_impl.1} parent=1 // pred_check_branch
      %32 = sbr.rel (0) target = $region25
    $region24: #{_mlp_forward_impl.1} parent=1 // pred_region
      %33 = dma.done [#allocation3], 6144
    $region25: #{_mlp_forward_impl.1} parent=1 // pred_fallthru
      _
    %v35 = vld [vmem:[%s0] sm:$0x3f]
    %v36 = vld [vmem:[%s0 + $0x6] sm:$0x3f]
    %v37 = vld [vmem:[%s0 + $0xc] sm:$0x3f]
    %v38 = vld [vmem:[%s0 + $0x12] sm:$0x3f]
    %v39 = vld [vmem:[%s0 + $0x18] sm:$0x3f]
    %v40 = vld [vmem:[%s0 + $0x1e] sm:$0x3f]
    %v41 = vld [vmem:[%s0 + $0x24] sm:$0x3f]
    %v42 = vld [vmem:[%s0 + $0x2a] sm:$0x3f]
    %v43 = vld [vmem:[#allocation2] sm:$0xf]
    %v44 = vld [vmem:[#allocation2 + $0x4] sm:$0xf]
    %v45 = vld [vmem:[#allocation2 + $0x8] sm:$0xf]
    %v46 = vld [vmem:[#allocation2 + $0xc] sm:$0xf]
    %v47 = vld [vmem:[#allocation2 + $0x10] sm:$0xf]
    %v48 = vld [vmem:[#allocation2 + $0x14] sm:$0xf]
    %v49 = vld [vmem:[#allocation2 + $0x18] sm:$0xf]
    %v50 = vld [vmem:[#allocation2 + $0x1c] sm:$0xf]
    %v51 = vld [vmem:[#allocation2 + $0x20] sm:$0xf]
    %v52 = vld [vmem:[#allocation2 + $0x24] sm:$0xf]
    %v53 = vld [vmem:[#allocation2 + $0x28] sm:$0xf]
    %v54 = vld [vmem:[#allocation2 + $0x2c] sm:$0xf]
    %v55 = vld [vmem:[#allocation2 + $0x30] sm:$0xf]
    %v56 = vld [vmem:[#allocation2 + $0x34] sm:$0xf]
    %v57 = vld [vmem:[#allocation2 + $0x38] sm:$0xf]
    %v58 = vld [vmem:[#allocation2 + $0x3c] sm:$0xf]
    %v59 = vld [vmem:[#allocation2 + $0x40] sm:$0xf]
    %v60 = vld [vmem:[#allocation2 + $0x44] sm:$0xf]
    %v61 = vld [vmem:[#allocation2 + $0x48] sm:$0xf]
    %v62 = vld [vmem:[#allocation2 + $0x4c] sm:$0xf]
    %v63 = vld [vmem:[#allocation2 + $0x50] sm:$0xf]
    %v64 = vld [vmem:[#allocation2 + $0x54] sm:$0xf]
    %v65 = vld [vmem:[#allocation2 + $0x58] sm:$0xf]
    %v66 = vld [vmem:[#allocation2 + $0x5c] sm:$0xf]
    %v67 = vld [vmem:[#allocation2 + $0x60] sm:$0xf]
    %v68 = vld [vmem:[#allocation2 + $0x64] sm:$0xf]
    %v69 = vld [vmem:[#allocation2 + $0x68] sm:$0xf]
    %v70 = vld [vmem:[#allocation2 + $0x6c] sm:$0xf]
    %v71 = vld [vmem:[#allocation2 + $0x70] sm:$0xf]
    %v72 = vld [vmem:[#allocation2 + $0x74] sm:$0xf]
    %v73 = vld [vmem:[#allocation2 + $0x78] sm:$0xf]
    %v74 = vld [vmem:[#allocation2 + $0x7c] sm:$0xf]
    %v75 = vld [vmem:[#allocation2 + $0x80] sm:$0xf]
    %v76 = vld [vmem:[#allocation2 + $0x84] sm:$0xf]
    %v77 = vld [vmem:[#allocation2 + $0x88] sm:$0xf]
    %v78 = vld [vmem:[#allocation2 + $0x8c] sm:$0xf]
    %v79 = vld [vmem:[#allocation2 + $0x90] sm:$0xf]
    %v80 = vld [vmem:[#allocation2 + $0x94] sm:$0xf]
    %v81 = vld [vmem:[#allocation2 + $0x98] sm:$0xf]
    %v82 = vld [vmem:[#allocation2 + $0x9c] sm:$0xf]
    %v83 = vld [vmem:[#allocation2 + $0xa0] sm:$0xf]
    %v84 = vld [vmem:[#allocation2 + $0xa4] sm:$0xf]
    %v85 = vld [vmem:[#allocation2 + $0xa8] sm:$0xf]
    %v86 = vld [vmem:[#allocation2 + $0xac] sm:$0xf]
    %v87 = vld [vmem:[#allocation2 + $0xb0] sm:$0xf]
    %v88 = vld [vmem:[#allocation2 + $0xb4] sm:$0xf]
    %v89 = vld [vmem:[#allocation2 + $0xb8] sm:$0xf]
    %v90 = vld [vmem:[#allocation2 + $0xbc] sm:$0xf]
    %v91 = vld [vmem:[#allocation2 + $0xc0] sm:$0xf]
    %v92 = vld [vmem:[#allocation2 + $0xc4] sm:$0xf]
    %v93 = vld [vmem:[#allocation2 + $0xc8] sm:$0xf]
    %v94 = vld [vmem:[#allocation2 + $0xcc] sm:$0xf]
    %v95 = vld [vmem:[#allocation2 + $0xd0] sm:$0xf]
    %v96 = vld [vmem:[#allocation2 + $0xd4] sm:$0xf]
    %v97 = vld [vmem:[#allocation2 + $0xd8] sm:$0xf]
    %v98 = vld [vmem:[#allocation2 + $0xdc] sm:$0xf]
    %v99 = vld [vmem:[#allocation2 + $0xe0] sm:$0xf]
    %v100 = vld [vmem:[#allocation2 + $0xe4] sm:$0xf]
    %v101 = vld [vmem:[#allocation2 + $0xe8] sm:$0xf]
    %v102 = vld [vmem:[#allocation2 + $0xec] sm:$0xf]
    %v103 = vld [vmem:[#allocation2 + $0xf0] sm:$0xf]
    %v104 = vld [vmem:[#allocation2 + $0xf4] sm:$0xf]
    %v105 = vld [vmem:[#allocation2 + $0xf8] sm:$0xf]
    %v106 = vld [vmem:[#allocation2 + $0xfc] sm:$0xf]
    %v107 = vld [vmem:[#allocation2 + $0x100] sm:$0xf]
    %v108 = vld [vmem:[#allocation2 + $0x104] sm:$0xf]
    %v109 = vld [vmem:[#allocation2 + $0x108] sm:$0xf]
    %v110 = vld [vmem:[#allocation2 + $0x10c] sm:$0xf]
    %v111 = vld [vmem:[#allocation2 + $0x110] sm:$0xf]
    %v112 = vld [vmem:[#allocation2 + $0x114] sm:$0xf]
    %v113 = vld [vmem:[#allocation2 + $0x118] sm:$0xf]
    %v114 = vld [vmem:[#allocation2 + $0x11c] sm:$0xf]
    %v115 = vld [vmem:[#allocation2 + $0x120] sm:$0xf]
    %v116 = vld [vmem:[#allocation2 + $0x124] sm:$0xf]
    %v117 = vld [vmem:[#allocation2 + $0x128] sm:$0xf]
    %v118 = vld [vmem:[#allocation2 + $0x12c] sm:$0xf]
    %v119 = vld [vmem:[#allocation2 + $0x130] sm:$0xf]
    %v120 = vld [vmem:[#allocation2 + $0x134] sm:$0xf]
    %v121 = vld [vmem:[#allocation2 + $0x138] sm:$0xf]
    %v122 = vld [vmem:[#allocation2 + $0x13c] sm:$0xf]
    %v123 = vld [vmem:[#allocation2 + $0x140] sm:$0xf]
    %v124 = vld [vmem:[#allocation2 + $0x144] sm:$0xf]
    %v125 = vld [vmem:[#allocation2 + $0x148] sm:$0xf]
    %v126 = vld [vmem:[#allocation2 + $0x14c] sm:$0xf]
    %v127 = vld [vmem:[#allocation2 + $0x150] sm:$0xf]
    %v128 = vld [vmem:[#allocation2 + $0x154] sm:$0xf]
    %v129 = vld [vmem:[#allocation2 + $0x158] sm:$0xf]
    %v130 = vld [vmem:[#allocation2 + $0x15c] sm:$0xf]
    %v131 = vld [vmem:[#allocation2 + $0x160] sm:$0xf]
    %v132 = vld [vmem:[#allocation2 + $0x164] sm:$0xf]
    %v133 = vld [vmem:[#allocation2 + $0x168] sm:$0xf]
    %v134 = vld [vmem:[#allocation2 + $0x16c] sm:$0xf]
    %v135 = vld [vmem:[#allocation2 + $0x170] sm:$0xf]
    %v136 = vld [vmem:[#allocation2 + $0x174] sm:$0xf]
    %v137 = vld [vmem:[#allocation2 + $0x178] sm:$0xf]
    %v138 = vld [vmem:[#allocation2 + $0x17c] sm:$0xf]
    %v139 = vld [vmem:[%s2] sm:$0x1]
    %v141 = vlaneseq
    %v142 = vshrl.u32 %v141, 7
    %v143 = vsub.s32 0, %v142
    %v144 = vrot.slane %v139, %v143
    %v154 = vcombine.low %v35, %v36
    %v155 = vcombine.high %v35, %v36
    %v156 = vcombine.low %v37, %v38
    %v157 = vcombine.high %v37, %v38
    %v158 = vcombine.low %v39, %v40
    %v159 = vcombine.high %v39, %v40
    %v160 = vcombine.low %v41, %v42
    %v161 = vcombine.high %v41, %v42
    %v163 = vunpack.c.l.s4 1966171168
    %v164 = vunpack.c.0.s8 %v163
    %v165 = vlaneseq
    %v166 = vshrl.u32 %v165, 7
    %v167 = vsub.s32 %v164, %v166
    %v168 = vrot.slane %v154, %v167
    %v170 = vunpack.c.l.s4 1966171168
    %v171 = vunpack.c.0.s8 %v170
    %v172 = vlaneseq
    %v173 = vshrl.u32 %v172, 7
    %v174 = vsub.s32 %v171, %v173
    %v175 = vrot.slane %v155, %v174
    %v177 = vunpack.c.l.s4 1966171168
    %v178 = vunpack.c.0.s8 %v177
    %v179 = vlaneseq
    %v180 = vshrl.u32 %v179, 7
    %v181 = vsub.s32 %v178, %v180
    %v182 = vrot.slane %v156, %v181
    %v184 = vunpack.c.l.s4 1966171168
    %v185 = vunpack.c.0.s8 %v184
    %v186 = vlaneseq
    %v187 = vshrl.u32 %v186, 7
    %v188 = vsub.s32 %v185, %v187
    %v189 = vrot.slane %v157, %v188
    %v191 = vunpack.c.l.s4 1966171168
    %v192 = vunpack.c.0.s8 %v191
    %v193 = vlaneseq
    %v194 = vshrl.u32 %v193, 7
    %v195 = vsub.s32 %v192, %v194
    %v196 = vrot.slane %v158, %v195
    %v198 = vunpack.c.l.s4 1966171168
    %v199 = vunpack.c.0.s8 %v198
    %v200 = vlaneseq
    %v201 = vshrl.u32 %v200, 7
    %v202 = vsub.s32 %v199, %v201
    %v203 = vrot.slane %v159, %v202
    %v205 = vunpack.c.l.s4 1966171168
    %v206 = vunpack.c.0.s8 %v205
    %v207 = vlaneseq
    %v208 = vshrl.u32 %v207, 7
    %v209 = vsub.s32 %v206, %v208
    %v210 = vrot.slane %v160, %v209
    %v212 = vunpack.c.l.s4 1966171168
    %v213 = vunpack.c.0.s8 %v212
    %v214 = vlaneseq
    %v215 = vshrl.u32 %v214, 7
    %v216 = vsub.s32 %v213, %v215
    %v217 = vrot.slane %v161, %v216
    %v218 = vcombine.low %v168, %v182
    %v219 = vcombine.high %v168, %v182
    %v220 = vcombine.low %v175, %v189
    %v221 = vcombine.high %v175, %v189
    %v222 = vcombine.low %v196, %v210
    %v223 = vcombine.high %v196, %v210
    %v224 = vcombine.low %v203, %v217
    %v225 = vcombine.high %v203, %v217
    %v227 = vunpack.c.l.s4 1966171168
    %v228 = vunpack.c.0.s8 %v227
    %v229 = vlaneseq
    %v230 = vshrl.u32 %v229, 7
    %v231 = vsub.s32 %v228, %v230
    %v232 = vrot.slane %v218, %v231
    %v234 = vunpack.c.l.s4 1966171168
    %v235 = vunpack.c.0.s8 %v234
    %v236 = vlaneseq
    %v237 = vshrl.u32 %v236, 7
    %v238 = vsub.s32 %v235, %v237
    %v239 = vrot.slane %v220, %v238
    %v241 = vunpack.c.l.s4 1966171168
    %v242 = vunpack.c.0.s8 %v241
    %v243 = vlaneseq
    %v244 = vshrl.u32 %v243, 7
    %v245 = vsub.s32 %v242, %v244
    %v246 = vrot.slane %v219, %v245
    %v248 = vunpack.c.l.s4 1966171168
    %v249 = vunpack.c.0.s8 %v248
    %v250 = vlaneseq
    %v251 = vshrl.u32 %v250, 7
    %v252 = vsub.s32 %v249, %v251
    %v253 = vrot.slane %v221, %v252
    %v255 = vunpack.c.l.s4 1966171168
    %v256 = vunpack.c.0.s8 %v255
    %v257 = vlaneseq
    %v258 = vshrl.u32 %v257, 7
    %v259 = vsub.s32 %v256, %v258
    %v260 = vrot.slane %v222, %v259
    %v262 = vunpack.c.l.s4 1966171168
    %v263 = vunpack.c.0.s8 %v262
    %v264 = vlaneseq
    %v265 = vshrl.u32 %v264, 7
    %v266 = vsub.s32 %v263, %v265
    %v267 = vrot.slane %v224, %v266
    %v269 = vunpack.c.l.s4 1966171168
    %v270 = vunpack.c.0.s8 %v269
    %v271 = vlaneseq
    %v272 = vshrl.u32 %v271, 7
    %v273 = vsub.s32 %v270, %v272
    %v274 = vrot.slane %v223, %v273
    %v276 = vunpack.c.l.s4 1966171168
    %v277 = vunpack.c.0.s8 %v276
    %v278 = vlaneseq
    %v279 = vshrl.u32 %v278, 7
    %v280 = vsub.s32 %v277, %v279
    %v281 = vrot.slane %v225, %v280
    %v282 = vcombine.low %v232, %v260
    %v283 = vcombine.high %v232, %v260
    %v284 = vcombine.low %v239, %v267
    %v285 = vcombine.low %v246, %v274
    %v286 = vcombine.high %v246, %v274
    %v287 = vcombine.low %v253, %v281
    %v390 = vunpack.c.l.b16 %v43
    %v391 = vunpack.c.l.b16 %v44
    %v392 = vunpack.c.l.b16 %v45
    %v393 = vunpack.c.l.b16 %v46
    %v394 = vunpack.c.l.b16 %v47
    %v395 = vunpack.c.l.b16 %v48
    %v396 = vunpack.c.l.b16 %v49
    %v397 = vunpack.c.l.b16 %v50
    %v398 = vunpack.c.l.b16 %v51
    %v399 = vunpack.c.l.b16 %v52
    %v400 = vunpack.c.l.b16 %v53
    %v401 = vunpack.c.l.b16 %v54
    %v402 = vunpack.c.l.b16 %v55
    %v403 = vunpack.c.l.b16 %v56
    %v404 = vunpack.c.l.b16 %v57
    %v405 = vunpack.c.l.b16 %v58
    %v406 = vunpack.c.l.b16 %v59
    %v407 = vunpack.c.l.b16 %v60
    %v408 = vunpack.c.l.b16 %v61
    %v409 = vunpack.c.l.b16 %v62
    %v410 = vunpack.c.l.b16 %v63
    %v411 = vunpack.c.l.b16 %v64
    %v412 = vunpack.c.l.b16 %v65
    %v413 = vunpack.c.l.b16 %v66
    %v414 = vunpack.c.l.b16 %v67
    %v415 = vunpack.c.l.b16 %v68
    %v416 = vunpack.c.l.b16 %v69
    %v417 = vunpack.c.l.b16 %v70
    %v418 = vunpack.c.l.b16 %v71
    %v419 = vunpack.c.l.b16 %v72
    %v420 = vunpack.c.l.b16 %v73
    %v421 = vunpack.c.l.b16 %v74
    %v422 = vunpack.c.l.b16 %v75
    %v423 = vunpack.c.l.b16 %v76
    %v424 = vunpack.c.l.b16 %v77
    %v425 = vunpack.c.l.b16 %v78
    %v426 = vunpack.c.l.b16 %v79
    %v427 = vunpack.c.l.b16 %v80
    %v428 = vunpack.c.l.b16 %v81
    %v429 = vunpack.c.l.b16 %v82
    %v430 = vunpack.c.l.b16 %v83
    %v431 = vunpack.c.l.b16 %v84
    %v432 = vunpack.c.l.b16 %v85
    %v433 = vunpack.c.l.b16 %v86
    %v434 = vunpack.c.l.b16 %v87
    %v435 = vunpack.c.l.b16 %v88
    %v436 = vunpack.c.l.b16 %v89
    %v437 = vunpack.c.l.b16 %v90
    %v438 = vunpack.c.l.b16 %v91
    %v439 = vunpack.c.l.b16 %v92
    %v440 = vunpack.c.l.b16 %v93
    %v441 = vunpack.c.l.b16 %v94
    %v442 = vunpack.c.l.b16 %v95
    %v443 = vunpack.c.l.b16 %v96
    %v444 = vunpack.c.l.b16 %v97
    %v445 = vunpack.c.l.b16 %v98
    %v446 = vunpack.c.l.b16 %v99
    %v447 = vunpack.c.l.b16 %v100
    %v448 = vunpack.c.l.b16 %v101
    %v449 = vunpack.c.l.b16 %v102
    %v450 = vunpack.c.l.b16 %v103
    %v451 = vunpack.c.l.b16 %v104
    %v452 = vunpack.c.l.b16 %v105
    %v453 = vunpack.c.l.b16 %v106
    %v454 = vunpack.c.l.b16 %v107
    %v455 = vunpack.c.l.b16 %v108
    %v456 = vunpack.c.l.b16 %v109
    %v457 = vunpack.c.l.b16 %v110
    %v458 = vunpack.c.l.b16 %v111
    %v459 = vunpack.c.l.b16 %v112
    %v460 = vunpack.c.l.b16 %v113
    %v461 = vunpack.c.l.b16 %v114
    %v462 = vunpack.c.l.b16 %v115
    %v463 = vunpack.c.l.b16 %v116
    %v464 = vunpack.c.l.b16 %v117
    %v465 = vunpack.c.l.b16 %v118
    %v466 = vunpack.c.l.b16 %v119
    %v467 = vunpack.c.l.b16 %v120
    %v468 = vunpack.c.l.b16 %v121
    %v469 = vunpack.c.l.b16 %v122
    %v470 = vunpack.c.l.b16 %v123
    %v471 = vunpack.c.l.b16 %v124
    %v472 = vunpack.c.l.b16 %v125
    %v473 = vunpack.c.l.b16 %v126
    %v474 = vunpack.c.l.b16 %v127
    %v475 = vunpack.c.l.b16 %v128
    %v476 = vunpack.c.l.b16 %v129
    %v477 = vunpack.c.l.b16 %v130
    %v478 = vunpack.c.l.b16 %v131
    %v479 = vunpack.c.l.b16 %v132
    %v480 = vunpack.c.l.b16 %v133
    %v481 = vunpack.c.l.b16 %v134
    %v482 = vunpack.c.l.b16 %v135
    %v483 = vunpack.c.l.b16 %v136
    %v484 = vunpack.c.l.b16 %v137
    %v485 = vunpack.c.l.b16 %v138
    %v486 = vpack.c.b16 %v391, %v390
    %v487 = vpack.c.b16 %v393, %v392
    %v488 = vpack.c.b16 %v395, %v394
    %v489 = vpack.c.b16 %v397, %v396
    %v490 = vpack.c.b16 %v399, %v398
    %v491 = vpack.c.b16 %v401, %v400
    %v492 = vpack.c.b16 %v403, %v402
    %v493 = vpack.c.b16 %v405, %v404
    %v494 = vpack.c.b16 %v407, %v406
    %v495 = vpack.c.b16 %v409, %v408
    %v496 = vpack.c.b16 %v411, %v410
    %v497 = vpack.c.b16 %v413, %v412
    %v498 = vpack.c.b16 %v415, %v414
    %v499 = vpack.c.b16 %v417, %v416
    %v500 = vpack.c.b16 %v419, %v418
    %v501 = vpack.c.b16 %v421, %v420
    %v502 = vpack.c.b16 %v423, %v422
    %v503 = vpack.c.b16 %v425, %v424
    %v504 = vpack.c.b16 %v427, %v426
    %v505 = vpack.c.b16 %v429, %v428
    %v506 = vpack.c.b16 %v431, %v430
    %v507 = vpack.c.b16 %v433, %v432
    %v508 = vpack.c.b16 %v435, %v434
    %v509 = vpack.c.b16 %v437, %v436
    %v510 = vpack.c.b16 %v439, %v438
    %v511 = vpack.c.b16 %v441, %v440
    %v512 = vpack.c.b16 %v443, %v442
    %v513 = vpack.c.b16 %v445, %v444
    %v514 = vpack.c.b16 %v447, %v446
    %v515 = vpack.c.b16 %v449, %v448
    %v516 = vpack.c.b16 %v451, %v450
    %v517 = vpack.c.b16 %v453, %v452
    %v518 = vpack.c.b16 %v455, %v454
    %v519 = vpack.c.b16 %v457, %v456
    %v520 = vpack.c.b16 %v459, %v458
    %v521 = vpack.c.b16 %v461, %v460
    %v522 = vpack.c.b16 %v463, %v462
    %v523 = vpack.c.b16 %v465, %v464
    %v524 = vpack.c.b16 %v467, %v466
    %v525 = vpack.c.b16 %v469, %v468
    %v526 = vpack.c.b16 %v471, %v470
    %v527 = vpack.c.b16 %v473, %v472
    %v528 = vpack.c.b16 %v475, %v474
    %v529 = vpack.c.b16 %v477, %v476
    %v530 = vpack.c.b16 %v479, %v478
    %v531 = vpack.c.b16 %v481, %v480
    %v532 = vpack.c.b16 %v483, %v482
    %v533 = vpack.c.b16 %v485, %v484
    %582 = vmatprep.subr.bf16.mxu0 0
    %583 = vmatpush1.bf16.msra.mxu0 %v486
    %584 = vmatprep.subr.bf16.mxu0 0
    %585 = vmatpush1.bf16.msra.mxu0 %v487
    %586 = vmatprep.subr.bf16.mxu0 0
    %587 = vmatpush1.bf16.msra.mxu0 %v488
    %588 = vmatprep.subr.bf16.mxu0 0
    %589 = vmatpush1.bf16.msra.mxu0 %v489
    %590 = vmatprep.subr.bf16.mxu0 0
    %591 = vmatpush1.bf16.msra.mxu0 %v490
    %592 = vmatprep.subr.bf16.mxu0 0
    %593 = vmatpush1.bf16.msra.mxu0 %v491
    %594 = vmatprep.subr.bf16.mxu0 0
    %595 = vmatpush1.bf16.msra.mxu0 %v492
    %596 = vmatprep.subr.bf16.mxu0 0
    %597 = vmatpush1.bf16.msra.mxu0 %v493
    %598 = vmatprep.subr.bf16.mxu0 0
    %599 = vmatpush1.bf16.msra.mxu0 %v494
    %600 = vmatprep.subr.bf16.mxu0 0
    %601 = vmatpush1.bf16.msra.mxu0 %v495
    %602 = vmatprep.subr.bf16.mxu0 0
    %603 = vmatpush1.bf16.msra.mxu0 %v496
    %604 = vmatprep.subr.bf16.mxu0 0
    %605 = vmatpush1.bf16.msra.mxu0 %v497
    %606 = vmatprep.subr.bf16.mxu0 0
    %607 = vmatpush1.bf16.msra.mxu0 %v498
    %608 = vmatprep.subr.bf16.mxu0 0
    %609 = vmatpush1.bf16.msra.mxu0 %v499
    %610 = vmatprep.subr.bf16.mxu0 0
    %611 = vmatpush1.bf16.msra.mxu0 %v500
    %612 = vmatprep.subr.bf16.mxu0 0
    %613 = vmatpush1.bf16.msra.mxu0 %v501
    %614 = vmatprep.mubr.bf16.mxu0 %v285
    %615 = vmatmul.mubr.bf16.gmra.mrb[0].mxu0 %v282
    %v616 = vpop.f32.mrb[0].mxu0
    %v617 = vadd.f32 %v144, %v616
    %v618 = vpop.f32.mrb[0].mxu0
    %v619 = vpop.f32.mrb[0].mxu0
    %v620 = vadd.f32 %v144, %v619
    %v621 = vpop.f32.mrb[0].mxu0
    %622 = vdwg.mxu0
    %623 = vmatprep.subr.bf16.mxu0 0
    %624 = vmatpush1.bf16.msra.mxu0 %v502
    %625 = vmatprep.subr.bf16.mxu0 0
    %626 = vmatpush1.bf16.msra.mxu0 %v503
    %627 = vmatprep.subr.bf16.mxu0 0
    %628 = vmatpush1.bf16.msra.mxu0 %v504
    %629 = vmatprep.subr.bf16.mxu0 0
    %630 = vmatpush1.bf16.msra.mxu0 %v505
    %631 = vmatprep.subr.bf16.mxu0 0
    %632 = vmatpush1.bf16.msra.mxu0 %v506
    %633 = vmatprep.subr.bf16.mxu0 0
    %634 = vmatpush1.bf16.msra.mxu0 %v507
    %635 = vmatprep.subr.bf16.mxu0 0
    %636 = vmatpush1.bf16.msra.mxu0 %v508
    %637 = vmatprep.subr.bf16.mxu0 0
    %638 = vmatpush1.bf16.msra.mxu0 %v509
    %639 = vmatprep.subr.bf16.mxu0 0
    %640 = vmatpush1.bf16.msra.mxu0 %v510
    %641 = vmatprep.subr.bf16.mxu0 0
    %642 = vmatpush1.bf16.msra.mxu0 %v511
    %643 = vmatprep.subr.bf16.mxu0 0
    %644 = vmatpush1.bf16.msra.mxu0 %v512
    %645 = vmatprep.subr.bf16.mxu0 0
    %646 = vmatpush1.bf16.msra.mxu0 %v513
    %647 = vmatprep.subr.bf16.mxu0 0
    %648 = vmatpush1.bf16.msra.mxu0 %v514
    %649 = vmatprep.subr.bf16.mxu0 0
    %650 = vmatpush1.bf16.msra.mxu0 %v515
    %651 = vmatprep.subr.bf16.mxu0 0
    %652 = vmatpush1.bf16.msra.mxu0 %v516
    %653 = vmatprep.subr.bf16.mxu0 0
    %654 = vmatpush1.bf16.msra.mxu0 %v517
    %655 = vmatprep.mubr.bf16.mxu0 %v286
    %656 = vmatmul.mubr.bf16.gmra.mrb[0].mxu0 %v283
    %v657 = vpop.f32.mrb[0].mxu0
    %v658 = vadd.f32 %v617, %v657
    %v659 = vpop.f32.mrb[0].mxu0
    %v660 = vpop.f32.mrb[0].mxu0
    %v661 = vadd.f32 %v620, %v660
    %v662 = vpop.f32.mrb[0].mxu0
    %663 = vdwg.mxu0
    %664 = vmatprep.subr.bf16.mxu0 0
    %665 = vmatpush1.bf16.msra.mxu0 %v518
    %666 = vmatprep.subr.bf16.mxu0 0
    %667 = vmatpush1.bf16.msra.mxu0 %v519
    %668 = vmatprep.subr.bf16.mxu0 0
    %669 = vmatpush1.bf16.msra.mxu0 %v520
    %670 = vmatprep.subr.bf16.mxu0 0
    %671 = vmatpush1.bf16.msra.mxu0 %v521
    %672 = vmatprep.subr.bf16.mxu0 0
    %673 = vmatpush1.bf16.msra.mxu0 %v522
    %674 = vmatprep.subr.bf16.mxu0 0
    %675 = vmatpush1.bf16.msra.mxu0 %v523
    %676 = vmatprep.subr.bf16.mxu0 0
    %677 = vmatpush1.bf16.msra.mxu0 %v524
    %678 = vmatprep.subr.bf16.mxu0 0
    %679 = vmatpush1.bf16.msra.mxu0 %v525
    %680 = vmatprep.subr.bf16.mxu0 0
    %681 = vmatpush1.bf16.msra.mxu0 %v526
    %682 = vmatprep.subr.bf16.mxu0 0
    %683 = vmatpush1.bf16.msra.mxu0 %v527
    %684 = vmatprep.subr.bf16.mxu0 0
    %685 = vmatpush1.bf16.msra.mxu0 %v528
    %686 = vmatprep.subr.bf16.mxu0 0
    %687 = vmatpush1.bf16.msra.mxu0 %v529
    %688 = vmatprep.subr.bf16.mxu0 0
    %689 = vmatpush1.bf16.msra.mxu0 %v530
    %690 = vmatprep.subr.bf16.mxu0 0
    %691 = vmatpush1.bf16.msra.mxu0 %v531
    %692 = vmatprep.subr.bf16.mxu0 0
    %693 = vmatpush1.bf16.msra.mxu0 %v532
    %694 = vmatprep.subr.bf16.mxu0 0
    %695 = vmatpush1.bf16.msra.mxu0 %v533
    %696 = vmatprep.mubr.bf16.mxu0 %v287
    %697 = vmatmul.mubr.bf16.gmra.mrb[0].mxu0 %v284
    %v698 = vpop.f32.mrb[0].mxu0
    %v699 = vadd.f32 %v658, %v698
    %v700 = vpop.f32.mrb[0].mxu0
    %v701 = vpop.f32.mrb[0].mxu0
    %v702 = vadd.f32 %v661, %v701
    %v703 = vpop.f32.mrb[0].mxu0
    %704 = vdwg.mxu0
    %v705 = vmax.f32 %v699, 0.0
    %v706 = vmax.f32 %v702, 0.0
    %v707 = vpack.c.bf16 %v706, %v705
    %v708 = vld [vmem:[%s3] sm:$0xf]
    %v709 = vld [vmem:[%s3 + $0x4] sm:$0xf]
    %v710 = vld [vmem:[%s3 + $0x8] sm:$0xf]
    %v711 = vld [vmem:[%s3 + $0xc] sm:$0xf]
    %v712 = vld [vmem:[%s3 + $0x10] sm:$0xf]
    %v713 = vld [vmem:[%s3 + $0x14] sm:$0xf]
    %v714 = vld [vmem:[%s3 + $0x18] sm:$0xf]
    %v715 = vld [vmem:[%s3 + $0x1c] sm:$0xf]
    %v716 = vld [vmem:[%s3 + $0x20] sm:$0xf]
    %v717 = vld [vmem:[%s3 + $0x24] sm:$0xf]
    %v718 = vld [vmem:[%s3 + $0x28] sm:$0xf]
    %v719 = vld [vmem:[%s3 + $0x2c] sm:$0xf]
    %v720 = vld [vmem:[%s3 + $0x30] sm:$0xf]
    %v721 = vld [vmem:[%s3 + $0x34] sm:$0xf]
    %v722 = vld [vmem:[%s3 + $0x38] sm:$0xf]
    %v723 = vld [vmem:[%s3 + $0x3c] sm:$0xf]
    %v724 = vld [vmem:[%s4] sm:$0x1]
    %v726 = vlaneseq
    %v727 = vshrl.u32 %v726, 7
    %v728 = vsub.s32 0, %v727
    %v729 = vrot.slane %v724, %v728
    %v747 = vunpack.c.l.b16 %v708
    %v748 = vunpack.c.l.b16 %v709
    %v749 = vunpack.c.l.b16 %v710
    %v750 = vunpack.c.l.b16 %v711
    %v751 = vunpack.c.l.b16 %v712
    %v752 = vunpack.c.l.b16 %v713
    %v753 = vunpack.c.l.b16 %v714
    %v754 = vunpack.c.l.b16 %v715
    %v755 = vunpack.c.l.b16 %v716
    %v756 = vunpack.c.l.b16 %v717
    %v757 = vunpack.c.l.b16 %v718
    %v758 = vunpack.c.l.b16 %v719
    %v759 = vunpack.c.l.b16 %v720
    %v760 = vunpack.c.l.b16 %v721
    %v761 = vunpack.c.l.b16 %v722
    %v762 = vunpack.c.l.b16 %v723
    %v763 = vpack.c.b16 %v748, %v747
    %v764 = vpack.c.b16 %v750, %v749
    %v765 = vpack.c.b16 %v752, %v751
    %v766 = vpack.c.b16 %v754, %v753
    %v767 = vpack.c.b16 %v756, %v755
    %v768 = vpack.c.b16 %v758, %v757
    %v769 = vpack.c.b16 %v760, %v759
    %v770 = vpack.c.b16 %v762, %v761
    %779 = vmatprep.subr.bf16.mxu0 0
    %780 = vmatpush1.bf16.msra.mxu0 %v763
    %781 = vmatprep.subr.bf16.mxu0 0
    %782 = vmatpush1.bf16.msra.mxu0 %v764
    %783 = vmatprep.subr.bf16.mxu0 0
    %784 = vmatpush1.bf16.msra.mxu0 %v765
    %785 = vmatprep.subr.bf16.mxu0 0
    %786 = vmatpush1.bf16.msra.mxu0 %v766
    %787 = vmatprep.subr.bf16.mxu0 0
    %788 = vmatpush1.bf16.msra.mxu0 %v767
    %789 = vmatprep.subr.bf16.mxu0 0
    %790 = vmatpush1.bf16.msra.mxu0 %v768
    %791 = vmatprep.subr.bf16.mxu0 0
    %792 = vmatpush1.bf16.msra.mxu0 %v769
    %793 = vmatprep.subr.bf16.mxu0 0
    %794 = vmatpush1.bf16.msra.mxu0 %v770
    %795 = vmatprep.subr.bf16.mxu0 0
    %796 = vmatpush1.bf16.msra.mxu0 0
    %797 = vmatprep.subr.bf16.mxu0 0
    %798 = vmatpush1.bf16.msra.mxu0 0
    %799 = vmatprep.subr.bf16.mxu0 0
    %800 = vmatpush1.bf16.msra.mxu0 0
    %801 = vmatprep.subr.bf16.mxu0 0
    %802 = vmatpush1.bf16.msra.mxu0 0
    %803 = vmatprep.subr.bf16.mxu0 0
    %804 = vmatpush1.bf16.msra.mxu0 0
    %805 = vmatprep.subr.bf16.mxu0 0
    %806 = vmatpush1.bf16.msra.mxu0 0
    %807 = vmatprep.subr.bf16.mxu0 0
    %808 = vmatpush1.bf16.msra.mxu0 0
    %809 = vmatprep.subr.bf16.mxu0 0
    %810 = vmatpush1.bf16.msra.mxu0 0
    %811 = vmatprep.mubr.bf16.mxu0 0
    %812 = vmatmul.mubr.bf16.gmra.mrb[0].mxu0 %v707
    %v813 = vpop.f32.mrb[0].mxu0
    %v814 = vadd.f32 %v729, %v813
    %v815 = vpop.f32.mrb[0].mxu0
    %v816 = vpop.f32.mrb[0].mxu0
    %v817 = vadd.f32 %v729, %v816
    %v818 = vpop.f32.mrb[0].mxu0
    %819 = vdwg.mxu0
    %v820 = vpack.c.bf16 %v817, %v814
    %v822 = vcombine.high %v820, %v820
    %v824 = vunpack.c.l.s4 1966171168
    %v825 = vunpack.c.0.s8 %v824
    %v826 = vlaneseq
    %v827 = vshrl.u32 %v826, 7
    %v828 = vsub.s32 %v825, %v827
    %v829 = vrot.slane %v820, %v828
    %v831 = vunpack.c.l.s4 1966171168
    %v832 = vunpack.c.0.s8 %v831
    %v833 = vlaneseq
    %v834 = vshrl.u32 %v833, 7
    %v835 = vsub.s32 %v832, %v834
    %v836 = vrot.slane %v822, %v835
    %v837 = vcombine.high %v829, %v829
    %v838 = vcombine.high %v836, %v836
    %v840 = vunpack.c.l.s4 1966171168
    %v841 = vunpack.c.0.s8 %v840
    %v842 = vlaneseq
    %v843 = vshrl.u32 %v842, 7
    %v844 = vsub.s32 %v841, %v843
    %v845 = vrot.slane %v829, %v844
    %v847 = vunpack.c.l.s4 1966171168
    %v848 = vunpack.c.0.s8 %v847
    %v849 = vlaneseq
    %v850 = vshrl.u32 %v849, 7
    %v851 = vsub.s32 %v848, %v850
    %v852 = vrot.slane %v836, %v851
    %v854 = vunpack.c.l.s4 1966171168
    %v855 = vunpack.c.0.s8 %v854
    %v856 = vlaneseq
    %v857 = vshrl.u32 %v856, 7
    %v858 = vsub.s32 %v855, %v857
    %v859 = vrot.slane %v837, %v858
    %v861 = vunpack.c.l.s4 1966171168
    %v862 = vunpack.c.0.s8 %v861
    %v863 = vlaneseq
    %v864 = vshrl.u32 %v863, 7
    %v865 = vsub.s32 %v862, %v864
    %v866 = vrot.slane %v838, %v865
    %v867 = vcombine.high %v845, %v845
    %v868 = vcombine.high %v852, %v852
    %v869 = vcombine.high %v859, %v859
    %v870 = vcombine.high %v866, %v866
    %879 = vst [vmem:[#allocation4] sm:$0x1] %v845
    %880 = vst [vmem:[#allocation4 + $0x1] sm:$0x1] %v859
    %881 = vst [vmem:[#allocation4 + $0x2] sm:$0x1] %v867
    %882 = vst [vmem:[#allocation4 + $0x3] sm:$0x1] %v869
    %883 = vst [vmem:[#allocation4 + $0x4] sm:$0x1] %v852
    %884 = vst [vmem:[#allocation4 + $0x5] sm:$0x1] %v866
    %885 = vst [vmem:[#allocation4 + $0x6] sm:$0x1] %v868
    %886 = vst [vmem:[#allocation4 + $0x7] sm:$0x1] %v870
    // Predicated region
    $region26: #{_mlp_forward_impl.1} parent=1 // pred_check
      _
    $region27: #{_mlp_forward_impl.1} parent=1 // pred_check_branch
      %888 = sbr.rel (0) target = $region29
    $region28: #{_mlp_forward_impl.1} parent=1 // pred_region
      // Predicated region
      $region30: #{_mlp_forward_impl.1} parent=28 // pred_check
        _
      $region31: #{_mlp_forward_impl.1} parent=28 // pred_check_branch
        %890 = sbr.rel (0) target = $region33
      $region32: #{_mlp_forward_impl.1} parent=28 // pred_region
        // Predicated region
        $region34: #{_mlp_forward_impl.1} parent=32 // pred_check
          _
        $region35: #{_mlp_forward_impl.1} parent=32 // pred_check_branch
          %892 = sbr.rel target = $region37
        $region36: #{_mlp_forward_impl.1} parent=32 // pred_region
          // Predicated region
          $region49: #{_mlp_forward_impl.1} parent=36 // pred_check
            _
          $region50: #{_mlp_forward_impl.1} parent=36 // pred_check_branch
            %907 = sbr.rel (0) target = $region52
          $region51: #{_mlp_forward_impl.1} parent=36 // pred_region
            loop: start=0, step=1, limit=1
            $region53: #{_mlp_forward_impl.1} parent=51 // loop_pre_header
              _
            $region54: #{_mlp_forward_impl.1} parent=51 // loop_header
              %s910 = sphi 0, %s914
              %p911 = scmp.ge.s32.totalorder %s910, 1
              %s915 = sphi [#allocation4], [#allocation4]
              %s916 = sphi %s5, %s5
            $region55: #{_mlp_forward_impl.1} parent=51 // loop_header_branch
              %913 = sbr.rel (%p911) target = $region59
            $region56: #{_mlp_forward_impl.1} parent=51 // loop_body
              %v917 = vld [vmem:[%s915] sm:$0x1]
              %918 = vst [vmem:[%s916] sm:$0x1] %v917
            $region57: #{_mlp_forward_impl.1} parent=51 // loop_footer
              %s914 = sadd.s32 1, %s910
            $region58: #{_mlp_forward_impl.1} parent=51 // loop_footer_branch
              %909 = sbr.rel target = $region54
            $region59: #{_mlp_forward_impl.1} parent=51 // loop_exit
              _
          $region52: #{_mlp_forward_impl.1} parent=36 // pred_fallthru
            _
        $region37: #{_mlp_forward_impl.1} parent=32 // pred_fallthru
          _
        // Predicated region
        $region38: #{_mlp_forward_impl.1} parent=32 // pred_check
          _
        $region39: #{_mlp_forward_impl.1} parent=32 // pred_check_branch
          %894 = sbr.rel (0) target = $region41
        $region40: #{_mlp_forward_impl.1} parent=32 // pred_region
          loop: start=0, step=1, limit=1
          $region42: #{_mlp_forward_impl.1} parent=40 // loop_pre_header
            _
          $region43: #{_mlp_forward_impl.1} parent=40 // loop_header
            %s897 = sphi 0, %s901
            %p898 = scmp.ge.s32.totalorder %s897, 1
            %s902 = sphi [#allocation4], [#allocation4]
            %s903 = sphi %s5, %s5
          $region44: #{_mlp_forward_impl.1} parent=40 // loop_header_branch
            %900 = sbr.rel (%p898) target = $region48
          $region45: #{_mlp_forward_impl.1} parent=40 // loop_body
            %v904 = vld [vmem:[%s902] sm:$0x1]
            %905 = vst [vmem:[%s903] sm:$0x1] %v904
          $region46: #{_mlp_forward_impl.1} parent=40 // loop_footer
            %s901 = sadd.s32 1, %s897
          $region47: #{_mlp_forward_impl.1} parent=40 // loop_footer_branch
            %896 = sbr.rel target = $region43
          $region48: #{_mlp_forward_impl.1} parent=40 // loop_exit
            _
        $region41: #{_mlp_forward_impl.1} parent=32 // pred_fallthru
          _
      $region33: #{_mlp_forward_impl.1} parent=28 // pred_fallthru
        _
      %919 = vnop
    $region29: #{_mlp_forward_impl.1} parent=1 // pred_fallthru
      _
    // Predicated region
    $region60: #{_mlp_forward_impl.1} parent=1 // pred_check
      _
    $region61: #{_mlp_forward_impl.1} parent=1 // pred_check_branch
      %921 = sbr.rel (0) target = $region63
    $region62: #{_mlp_forward_impl.1} parent=1 // pred_region
      _
    $region63: #{_mlp_forward_impl.1} parent=1 // pred_fallthru
      _
    %922 = vsyncpa [#allocation3], 1

</llo_original>
